<compile_context>
chip_gen: v6e
topology: v6e:2x2x1
jax: 0.10.0
libtpu: 0.0.40
codegen_flags: <defaults>
</compile_context>

<pallas_src>
import functools

import jax
import jax.numpy as jnp
from jax.experimental import pallas as pl
from jax.experimental.pallas import tpu as pltpu

_VMEM_LIMIT = 32 * 1024 * 1024     # explicit scoped-VMEM budget (portable to v7x)
_TILE_ROWS = 512                   # M rows per grid step (standard layers)
_TILE_COLS = 2048                  # M cols per grid step (transposed layer 1)


def _round_up(x, m):
    return -(-x // m) * m


def _tiling(m, target, quantum):
    """Pick an M tile (multiple of `quantum`) and the zero-padded M extent."""
    tile = min(target, _round_up(m, quantum))
    m_pad = _round_up(m, tile)
    return tile, m_pad, m_pad // tile


# --------------------------------------------------------------------------- #
# Pallas kernels
# --------------------------------------------------------------------------- #
def _conv_mm_kernel(p_ref, w_ref, s_ref, b_ref, o_ref):
    """(tile_m, K) @ (K, Cout) + fused per-channel affine + LeakyReLU(0.2)."""
    y = jnp.dot(p_ref[...], w_ref[...], preferred_element_type=jnp.float32)
    y = y * s_ref[...] + b_ref[...]                       # (1, Cout) broadcast, f32
    y = jnp.where(y >= 0.0, y, 0.2 * y)
    o_ref[...] = y.astype(o_ref.dtype)


def _conv_mm_t_kernel(pt_ref, wt_ref, s_ref, b_ref, o_ref):
    """Transposed contraction (Cout, K) @ (K, tile_m): lane-dense output."""
    y = jnp.dot(wt_ref[...], pt_ref[...], preferred_element_type=jnp.float32)
    y = y * s_ref[...] + b_ref[...]                       # (Cout, 1) broadcast, f32
    y = jnp.where(y >= 0.0, y, 0.2 * y)
    o_ref[...] = y.astype(o_ref.dtype)


def _conv_mm_head_kernel(p_ref, w_ref, s_ref, b_ref, w4_ref, b4_ref, o_ref, *, rps):
    """Layer-3 conv+BN+LeakyReLU with the conv4+sigmoid head fused in."""
    y = jnp.dot(p_ref[...], w_ref[...], preferred_element_type=jnp.float32)
    y = y * s_ref[...] + b_ref[...]
    y = jnp.where(y >= 0.0, y, 0.2 * y)                   # (tile_m, Cout) f32
    t = y.shape[0] // rps                                 # samples in this tile
    y3 = y.reshape(t, rps, y.shape[1])                    # (t, rps, Cout)
    z = jnp.sum(y3 * w4_ref[...][None, :, :], axis=2)     # (t, rps)  lane reduce
    logit = jnp.sum(z, axis=1, keepdims=True) + b4_ref[...]   # (t, 1)
    o_ref[...] = jax.nn.sigmoid(logit)


# --------------------------------------------------------------------------- #
# Wrappers (im2col is layout plumbing done XLA-side)
# --------------------------------------------------------------------------- #
def _im2col(x, k, stride, pad):
    """x: (B, H, W, C) NHWC -> patches (B, OH, OW, k*k*C), K-order (kh, kw, ci)."""
    xp = jnp.pad(x, ((0, 0), (pad, pad), (pad, pad), (0, 0)))
    _, hp, wp, _ = xp.shape
    oh = (hp - k) // stride + 1
    ow = (wp - k) // stride + 1
    cols = [
        xp[:, kh:kh + stride * (oh - 1) + 1:stride,
              kw:kw + stride * (ow - 1) + 1:stride, :]
        for kh in range(k) for kw in range(k)
    ]
    return jnp.concatenate(cols, axis=-1), oh, ow


def _conv_block(x, w_flat, scale, bias, k, stride, pad):
    """conv(+BN)+LeakyReLU as one M-tiled Pallas matmul; bf16 in / bf16 out."""
    b = x.shape[0]
    patches, oh, ow = _im2col(x, k, stride, pad)
    kk = patches.shape[-1]
    cout = w_flat.shape[-1]
    m = b * oh * ow
    p = patches.reshape(m, kk).astype(jnp.bfloat16)
    tile, m_pad, grid = _tiling(m, _TILE_ROWS, 16)
    if m_pad != m:
        p = jnp.pad(p, ((0, m_pad - m), (0, 0)))

    cost = pl.CostEstimate(
        flops=2 * m_pad * kk * cout, transcendentals=0,
        bytes_accessed=2 * (m_pad * kk + kk * cout + m_pad * cout) + 8 * cout)

    y = pl.pallas_call(
        _conv_mm_kernel,
        out_shape=jax.ShapeDtypeStruct((m_pad, cout), jnp.bfloat16),
        grid=(grid,),
        in_specs=[
            pl.BlockSpec((tile, kk), lambda i: (i, 0)),
            pl.BlockSpec((kk, cout), lambda i: (0, 0)),
            pl.BlockSpec((1, cout), lambda i: (0, 0)),
            pl.BlockSpec((1, cout), lambda i: (0, 0)),
        ],
        out_specs=pl.BlockSpec((tile, cout), lambda i: (i, 0)),
        compiler_params=pltpu.CompilerParams(
            dimension_semantics=("parallel",), vmem_limit_bytes=_VMEM_LIMIT),
        cost_estimate=cost,
    )(p, w_flat, scale, bias)
    return y[:m].reshape(b, oh, ow, cout)


def _conv_block_t(x, w_t, scale_col, bias_col, k, stride, pad):
    """Layer 1 (tiny Cout): transposed contraction -> lane-dense stores."""
    b = x.shape[0]
    patches, oh, ow = _im2col(x, k, stride, pad)
    kk = patches.shape[-1]
    cout = w_t.shape[0]
    m = b * oh * ow
    pt = patches.reshape(m, kk).T.astype(jnp.bfloat16)        # (K, M)
    tile, m_pad, grid = _tiling(m, _TILE_COLS, 128)
    if m_pad != m:
        pt = jnp.pad(pt, ((0, 0), (0, m_pad - m)))

    cost = pl.CostEstimate(
        flops=2 * m_pad * kk * cout, transcendentals=0,
        bytes_accessed=2 * (m_pad * kk + kk * cout + m_pad * cout) + 8 * cout)

    yt = pl.pallas_call(
        _conv_mm_t_kernel,
        out_shape=jax.ShapeDtypeStruct((cout, m_pad), jnp.bfloat16),
        grid=(grid,),
        in_specs=[
            pl.BlockSpec((kk, tile), lambda i: (0, i)),
            pl.BlockSpec((cout, kk), lambda i: (0, 0)),
            pl.BlockSpec((cout, 1), lambda i: (0, 0)),
            pl.BlockSpec((cout, 1), lambda i: (0, 0)),
        ],
        out_specs=pl.BlockSpec((cout, tile), lambda i: (0, i)),
        compiler_params=pltpu.CompilerParams(
            dimension_semantics=("parallel",), vmem_limit_bytes=_VMEM_LIMIT),
        cost_estimate=cost,
    )(pt, w_t, scale_col, bias_col)
    return yt[:, :m].T.reshape(b, oh, ow, cout)


def _conv_block_head(x, w_flat, scale, bias, w4_mat, b4, k, stride, pad):
    """Layer-3 conv+BN+LeakyReLU fused with the conv4+sigmoid head -> (B, 1)."""
    b = x.shape[0]
    patches, oh, ow = _im2col(x, k, stride, pad)
    kk = patches.shape[-1]
    cout = w_flat.shape[-1]
    rps = oh * ow                                  # rows per sample (16 for 32x32 in)
    m = b * rps
    p = patches.reshape(m, kk).astype(jnp.bfloat16)
    target = max(rps, (_TILE_ROWS // rps) * rps)   # keep tiles sample-aligned
    tile, m_pad, grid = _tiling(m, target, rps)
    if m_pad != m:
        p = jnp.pad(p, ((0, m_pad - m), (0, 0)))
    samples_pad = m_pad // rps

    cost = pl.CostEstimate(
        flops=2 * m_pad * kk * cout + 2 * m_pad * cout,
        transcendentals=samples_pad,
        bytes_accessed=(2 * (m_pad * kk + kk * cout)
                        + 4 * (rps * cout + samples_pad + 1) + 8 * cout))

    out = pl.pallas_call(
        functools.partial(_conv_mm_head_kernel, rps=rps),
        out_shape=jax.ShapeDtypeStruct((samples_pad, 1), jnp.float32),
        grid=(grid,),
        in_specs=[
            pl.BlockSpec((tile, kk), lambda i: (i, 0)),
            pl.BlockSpec((kk, cout), lambda i: (0, 0)),
            pl.BlockSpec((1, cout), lambda i: (0, 0)),
            pl.BlockSpec((1, cout), lambda i: (0, 0)),
            pl.BlockSpec((rps, cout), lambda i: (0, 0)),
            pl.BlockSpec((1, 1), lambda i: (0, 0)),
        ],
        out_specs=pl.BlockSpec((tile // rps, 1), lambda i: (i, 0)),
        compiler_params=pltpu.CompilerParams(
            dimension_semantics=("parallel",), vmem_limit_bytes=_VMEM_LIMIT),
        cost_estimate=cost,
    )(p, w_flat, scale, bias, w4_mat, b4)
    return out[:b]


def discriminator_forward(x_nchw, prep):
    """x_nchw: (B, C, H, W) f32. Returns (B, 1, 1, 1) f32 (mnist=False variant)."""
    h = jnp.transpose(x_nchw, (0, 2, 3, 1))                          # NHWC f32
    h = _conv_block_t(h, prep["w1t"], prep["s1c"], prep["o1c"], 4, 2, 1)
    h = _conv_block(h, prep["w2f"], prep["s2"], prep["o2"], 4, 2, 1)
    out = _conv_block_head(h, prep["w3f"], prep["s3"], prep["o3"],
                           prep["w4m"], prep["b4"], 4, 2, 1)         # (B, 1)
    return out.reshape(-1, 1, 1, 1)


# --------------------------------------------------------------------------- #
# Parameter construction (done ONCE, hoisted out of the forward call)
# --------------------------------------------------------------------------- #
def init_params(key, d=32, channels=1):
    """Synthetic deterministic params in PyTorch layout (Conv2d: (Cout,Cin,KH,KW))."""
    c1, c2, c3 = d // 2, d * 2, d * 4
    ks = iter(jax.random.split(key, 16))

    def conv_w(co, ci, kh, kw):
        fan_in = ci * kh * kw
        return jax.random.normal(next(ks), (co, ci, kh, kw), jnp.float32) / (fan_in ** 0.5)

    def bias(c):
        return 0.05 * jax.random.normal(next(ks), (c,), jnp.float32)

    def bn_stats(c):
        g = 1.0 + 0.2 * jax.random.normal(next(ks), (c,), jnp.float32)
        be = 0.1 * jax.random.normal(next(ks), (c,), jnp.float32)
        m = 0.1 * jax.random.normal(next(ks), (c,), jnp.float32)
        v = 0.5 + jax.random.uniform(next(ks), (c,), jnp.float32)
        return g, be, m, v

    w1, b1 = conv_w(c1, channels, 4, 4), bias(c1)
    w2, b2 = conv_w(c2, c1, 4, 4), bias(c2)
    g2, be2, m2, v2 = bn_stats(c2)
    w3, b3 = conv_w(c3, c2, 4, 4), bias(c3)
    g3, be3, m3, v3 = bn_stats(c3)
    w4, b4 = conv_w(1, c3, 4, 4), bias(1)
    return dict(w1=w1, b1=b1, w2=w2, b2=b2, g2=g2, be2=be2, m2=m2, v2=v2,
                w3=w3, b3=b3, g3=g3, be3=be3, m3=m3, v3=v3, w4=w4, b4=b4)


def prepare_params(p, eps=1e-5):
    """Pre-flatten / pre-transpose / pre-cast weights once; fuse conv-bias + BN."""
    def wflat(w):
        co, ci, kh, kw = w.shape
        return jnp.transpose(w, (2, 3, 1, 0)).reshape(kh * kw * ci, co).astype(jnp.bfloat16)

    def bn_affine(b_conv, g, be, m, v):
        s = g / jnp.sqrt(v + eps)
        return (s.reshape(1, -1).astype(jnp.float32),
                (be + (b_conv - m) * s).reshape(1, -1).astype(jnp.float32))

    c1 = p["w1"].shape[0]
    c3 = p["w3"].shape[0]
    # Layer 1: transposed weight (Cout, KH*KW*Cin) with K-order (kh, kw, ci).
    w1t = jnp.transpose(p["w1"], (0, 2, 3, 1)).reshape(c1, -1).astype(jnp.bfloat16)
    # Head: conv4 weight as (KH*KW, Cin3) f32, rows match layer-3 (oh*ow) rows.
    w4m = jnp.transpose(p["w4"], (2, 3, 0, 1)).reshape(-1, c3).astype(jnp.float32)
    prep = {
        "w1t": w1t,
        "s1c": jnp.ones((c1, 1), jnp.float32),
        "o1c": p["b1"].reshape(c1, 1).astype(jnp.float32),
        "w2f": wflat(p["w2"]),
        "w3f": wflat(p["w3"]),
        "w4m": w4m,
        "b4": p["b4"].reshape(1, 1).astype(jnp.float32),
    }
    prep["s2"], prep["o2"] = bn_affine(p["b2"], p["g2"], p["be2"], p["m2"], p["v2"])
    prep["s3"], prep["o3"] = bn_affine(p["b3"], p["g3"], p["be3"], p["m3"], p["v3"])
    return prep


# --------------------------------------------------------------------------- #
# Pure-JAX reference (weights quantized to bf16 like the kernel sees them)
# --------------------------------------------------------------------------- #
def reference_forward(x, p, eps=1e-5):
    q = lambda w: w.astype(jnp.bfloat16).astype(jnp.float32)

    def conv(h, w, b, stride, pad):
        y = jax.lax.conv_general_dilated(
            h, w, window_strides=(stride, stride),
            padding=[(pad, pad), (pad, pad)],
            dimension_numbers=("NCHW", "OIHW", "NCHW"),
            precision=jax.lax.Precision.HIGHEST)
        return y + b.reshape(1, -1, 1, 1)

    def bn(h, g, be, m, v):
        s = (g / jnp.sqrt(v + eps)).reshape(1, -1, 1, 1)
        return (h - m.reshape(1, -1, 1, 1)) * s + be.reshape(1, -1, 1, 1)

    lrelu = lambda t: jnp.where(t >= 0, t, 0.2 * t)

    h = lrelu(conv(x, q(p["w1"]), p["b1"], 2, 1))
    h = lrelu(bn(conv(h, q(p["w2"]), p["b2"], 2, 1), p["g2"], p["be2"], p["m2"], p["v2"]))
    h = lrelu(bn(conv(h, q(p["w3"]), p["b3"], 2, 1), p["g3"], p["be3"], p["m3"], p["v3"]))
    return jax.nn.sigmoid(conv(h, p["w4"], p["b4"], 1, 0))


# --------------------------------------------------------------------------- #
if __name__ == "__main__":
    d, channels, batch, hw = 32, 1, 2, 32                    # 32x32 -> 16 -> 8 -> 4 -> 1

    key = jax.random.PRNGKey(0)
    kx, kp = jax.random.split(key)
    x = jax.random.normal(kx, (batch, channels, hw, hw), jnp.float32)

    raw = init_params(kp, d=d, channels=channels)
    prep = prepare_params(raw)

    fwd = jax.jit(discriminator_forward)
    out = jax.block_until_ready(fwd(x, prep))

    ref = reference_forward(x, raw)
    assert out.shape == (batch, 1, 1, 1), out.shape
    assert jnp.allclose(out, ref, atol=2e-2, rtol=0.0), (out.ravel(), ref.ravel())
    print("KERNEL_OK")
</pallas_src>

<mosaic_0001>
module attributes {stable_mosaic.version = 11 : i64} {
  func.func @_conv_mm_t_kernel(%arg0: i32, %arg1: memref<16x512xbf16, #tpu.memory_space<vmem>>, %arg2: memref<16x16xbf16, #tpu.memory_space<vmem>>, %arg3: memref<16x1xf32, #tpu.memory_space<vmem>>, %arg4: memref<16x1xf32, #tpu.memory_space<vmem>>, %arg5: memref<16x512xbf16, #tpu.memory_space<vmem>>) attributes {dimension_semantics = [#tpu.dimension_semantics<parallel>], iteration_bounds = array<i64: 1>, scalar_prefetch = 0 : i64, scratch_operands = 0 : i64, tpu.core_type = #tpu.core_type<tc>, window_params = [{transform_indices = @transform_0, window_bounds = array<i64: 16, 512>}, {pipeline_mode = #tpu.pipeline_mode<synchronous>, transform_indices = @transform_1, window_bounds = array<i64: 16, 16>}, {pipeline_mode = #tpu.pipeline_mode<synchronous>, transform_indices = @transform_2, window_bounds = array<i64: 16, 1>}, {pipeline_mode = #tpu.pipeline_mode<synchronous>, transform_indices = @transform_3, window_bounds = array<i64: 16, 1>}, {transform_indices = @transform_4, window_bounds = array<i64: 16, 512>}]} {
    %c0 = arith.constant 0 : index
    %c0_0 = arith.constant 0 : index
    %0 = vector.load %arg2[%c0, %c0_0] : memref<16x16xbf16, #tpu.memory_space<vmem>>, vector<16x16xbf16>
    %c0_1 = arith.constant 0 : index
    %c0_2 = arith.constant 0 : index
    %1 = vector.load %arg1[%c0_1, %c0_2] : memref<16x512xbf16, #tpu.memory_space<vmem>>, vector<16x512xbf16>
    %cst = arith.constant dense<0.000000e+00> : vector<16x512xf32>
    %2 = tpu.matmul %0, %1, %cst {dimension_numbers = #tpu.dot_dimension_numbers<[1], [0], [0], [1], [0, 0, 1, 1], [], []>} : vector<16x16xbf16>, vector<16x512xbf16>, vector<16x512xf32> -> vector<16x512xf32>
    %c0_3 = arith.constant 0 : index
    %c0_4 = arith.constant 0 : index
    %3 = vector.load %arg3[%c0_3, %c0_4] : memref<16x1xf32, #tpu.memory_space<vmem>>, vector<16x1xf32>
    %4 = vector.broadcast %3 : vector<16x1xf32> to vector<16x512xf32>
    %5 = arith.mulf %2, %4 : vector<16x512xf32>
    %c0_5 = arith.constant 0 : index
    %c0_6 = arith.constant 0 : index
    %6 = vector.load %arg4[%c0_5, %c0_6] : memref<16x1xf32, #tpu.memory_space<vmem>>, vector<16x1xf32>
    %7 = vector.broadcast %6 : vector<16x1xf32> to vector<16x512xf32>
    %8 = arith.addf %5, %7 : vector<16x512xf32>
    %cst_7 = arith.constant 0.000000e+00 : f32
    %9 = vector.broadcast %cst_7 : f32 to vector<16x512xf32>
    %10 = arith.cmpf oge, %8, %9 : vector<16x512xf32>
    %cst_8 = arith.constant 2.000000e-01 : f32
    %11 = vector.broadcast %cst_8 : f32 to vector<16x512xf32>
    %12 = arith.mulf %11, %8 : vector<16x512xf32>
    %13 = arith.select %10, %8, %12 : vector<16x512xi1>, vector<16x512xf32>
    %14 = arith.truncf %13 : vector<16x512xf32> to vector<16x512xbf16>
    %c0_9 = arith.constant 0 : index
    %c0_10 = arith.constant 0 : index
    %15 = vector.load %arg5[%c0_9, %c0_10] : memref<16x512xbf16, #tpu.memory_space<vmem>>, vector<16x512xbf16>
    tpu.vector_store %arg5[%c0_9, %c0_10], %14 {strides = array<i32>} : memref<16x512xbf16, #tpu.memory_space<vmem>>, vector<16x512xbf16>,
    return
  }
  func.func @transform_0(%arg0: i32) -> (i32, i32) {
    %c0_i32 = arith.constant 0 : i32
    %c0_i32_0 = arith.constant 0 : i32
    return %c0_i32, %arg0 : i32, i32
  }
  func.func @transform_1(%arg0: i32) -> (i32, i32) {
    %c0_i32 = arith.constant 0 : i32
    %c0_i32_0 = arith.constant 0 : i32
    %c0_i32_1 = arith.constant 0 : i32
    return %c0_i32, %c0_i32_0 : i32, i32
  }
  func.func @transform_2(%arg0: i32) -> (i32, i32) {
    %c0_i32 = arith.constant 0 : i32
    %c0_i32_0 = arith.constant 0 : i32
    %c0_i32_1 = arith.constant 0 : i32
    return %c0_i32, %c0_i32_0 : i32, i32
  }
  func.func @transform_3(%arg0: i32) -> (i32, i32) {
    %c0_i32 = arith.constant 0 : i32
    %c0_i32_0 = arith.constant 0 : i32
    %c0_i32_1 = arith.constant 0 : i32
    return %c0_i32, %c0_i32_0 : i32, i32
  }
  func.func @transform_4(%arg0: i32) -> (i32, i32) {
    %c0_i32 = arith.constant 0 : i32
    %c0_i32_0 = arith.constant 0 : i32
    return %c0_i32, %arg0 : i32, i32
  }
}

module attributes {stable_mosaic.version = 11 : i64} {
  func.func @_conv_mm_kernel(%arg0: i32, %arg1: memref<128x256xbf16, #tpu.memory_space<vmem>>, %arg2: memref<256x64xbf16, #tpu.memory_space<vmem>>, %arg3: memref<1x64xf32, #tpu.memory_space<vmem>>, %arg4: memref<1x64xf32, #tpu.memory_space<vmem>>, %arg5: memref<128x64xbf16, #tpu.memory_space<vmem>>) attributes {dimension_semantics = [#tpu.dimension_semantics<parallel>], iteration_bounds = array<i64: 1>, scalar_prefetch = 0 : i64, scratch_operands = 0 : i64, tpu.core_type = #tpu.core_type<tc>, window_params = [{transform_indices = @transform_0, window_bounds = array<i64: 128, 256>}, {pipeline_mode = #tpu.pipeline_mode<synchronous>, transform_indices = @transform_1, window_bounds = array<i64: 256, 64>}, {pipeline_mode = #tpu.pipeline_mode<synchronous>, transform_indices = @transform_2, window_bounds = array<i64: 1, 64>}, {pipeline_mode = #tpu.pipeline_mode<synchronous>, transform_indices = @transform_3, window_bounds = array<i64: 1, 64>}, {transform_indices = @transform_4, window_bounds = array<i64: 128, 64>}]} {
    %c0 = arith.constant 0 : index
    %c0_0 = arith.constant 0 : index
    %0 = vector.load %arg1[%c0, %c0_0] : memref<128x256xbf16, #tpu.memory_space<vmem>>, vector<128x256xbf16>
    %c0_1 = arith.constant 0 : index
    %c0_2 = arith.constant 0 : index
    %1 = vector.load %arg2[%c0_1, %c0_2] : memref<256x64xbf16, #tpu.memory_space<vmem>>, vector<256x64xbf16>
    %cst = arith.constant dense<0.000000e+00> : vector<128x64xf32>
    %2 = tpu.matmul %0, %1, %cst {dimension_numbers = #tpu.dot_dimension_numbers<[1], [0], [0], [1], [0, 0, 1, 1], [], []>} : vector<128x256xbf16>, vector<256x64xbf16>, vector<128x64xf32> -> vector<128x64xf32>
    %c0_3 = arith.constant 0 : index
    %c0_4 = arith.constant 0 : index
    %3 = vector.load %arg3[%c0_3, %c0_4] : memref<1x64xf32, #tpu.memory_space<vmem>>, vector<1x64xf32>
    %4 = vector.broadcast %3 : vector<1x64xf32> to vector<128x64xf32>
    %5 = arith.mulf %2, %4 : vector<128x64xf32>
    %c0_5 = arith.constant 0 : index
    %c0_6 = arith.constant 0 : index
    %6 = vector.load %arg4[%c0_5, %c0_6] : memref<1x64xf32, #tpu.memory_space<vmem>>, vector<1x64xf32>
    %7 = vector.broadcast %6 : vector<1x64xf32> to vector<128x64xf32>
    %8 = arith.addf %5, %7 : vector<128x64xf32>
    %cst_7 = arith.constant 0.000000e+00 : f32
    %9 = vector.broadcast %cst_7 : f32 to vector<128x64xf32>
    %10 = arith.cmpf oge, %8, %9 : vector<128x64xf32>
    %cst_8 = arith.constant 2.000000e-01 : f32
    %11 = vector.broadcast %cst_8 : f32 to vector<128x64xf32>
    %12 = arith.mulf %11, %8 : vector<128x64xf32>
    %13 = arith.select %10, %8, %12 : vector<128x64xi1>, vector<128x64xf32>
    %14 = arith.truncf %13 : vector<128x64xf32> to vector<128x64xbf16>
    %c0_9 = arith.constant 0 : index
    %c0_10 = arith.constant 0 : index
    %15 = vector.load %arg5[%c0_9, %c0_10] : memref<128x64xbf16, #tpu.memory_space<vmem>>, vector<128x64xbf16>
    tpu.vector_store %arg5[%c0_9, %c0_10], %14 {strides = array<i32>} : memref<128x64xbf16, #tpu.memory_space<vmem>>, vector<128x64xbf16>,
    return
  }
  func.func @transform_0(%arg0: i32) -> (i32, i32) {
    %c0_i32 = arith.constant 0 : i32
    %c0_i32_0 = arith.constant 0 : i32
    return %arg0, %c0_i32 : i32, i32
  }
  func.func @transform_1(%arg0: i32) -> (i32, i32) {
    %c0_i32 = arith.constant 0 : i32
    %c0_i32_0 = arith.constant 0 : i32
    %c0_i32_1 = arith.constant 0 : i32
    return %c0_i32, %c0_i32_0 : i32, i32
  }
  func.func @transform_2(%arg0: i32) -> (i32, i32) {
    %c0_i32 = arith.constant 0 : i32
    %c0_i32_0 = arith.constant 0 : i32
    %c0_i32_1 = arith.constant 0 : i32
    return %c0_i32, %c0_i32_0 : i32, i32
  }
  func.func @transform_3(%arg0: i32) -> (i32, i32) {
    %c0_i32 = arith.constant 0 : i32
    %c0_i32_0 = arith.constant 0 : i32
    %c0_i32_1 = arith.constant 0 : i32
    return %c0_i32, %c0_i32_0 : i32, i32
  }
  func.func @transform_4(%arg0: i32) -> (i32, i32) {
    %c0_i32 = arith.constant 0 : i32
    %c0_i32_0 = arith.constant 0 : i32
    return %arg0, %c0_i32 : i32, i32
  }
}

module attributes {stable_mosaic.version = 11 : i64} {
  func.func @_conv_mm_head_kernel(%arg0: i32, %arg1: memref<32x1024xbf16, #tpu.memory_space<vmem>>, %arg2: memref<1024x128xbf16, #tpu.memory_space<vmem>>, %arg3: memref<1x128xf32, #tpu.memory_space<vmem>>, %arg4: memref<1x128xf32, #tpu.memory_space<vmem>>, %arg5: memref<16x128xf32, #tpu.memory_space<vmem>>, %arg6: memref<1x1xf32, #tpu.memory_space<vmem>>, %arg7: memref<2x1xf32, #tpu.memory_space<vmem>>) attributes {dimension_semantics = [#tpu.dimension_semantics<parallel>], iteration_bounds = array<i64: 1>, scalar_prefetch = 0 : i64, scratch_operands = 0 : i64, tpu.core_type = #tpu.core_type<tc>, window_params = [{transform_indices = @transform_0, window_bounds = array<i64: 32, 1024>}, {pipeline_mode = #tpu.pipeline_mode<synchronous>, transform_indices = @transform_1, window_bounds = array<i64: 1024, 128>}, {pipeline_mode = #tpu.pipeline_mode<synchronous>, transform_indices = @transform_2, window_bounds = array<i64: 1, 128>}, {pipeline_mode = #tpu.pipeline_mode<synchronous>, transform_indices = @transform_3, window_bounds = array<i64: 1, 128>}, {pipeline_mode = #tpu.pipeline_mode<synchronous>, transform_indices = @transform_4, window_bounds = array<i64: 16, 128>}, {pipeline_mode = #tpu.pipeline_mode<synchronous>, transform_indices = @transform_5, window_bounds = array<i64: 1, 1>}, {transform_indices = @transform_6, window_bounds = array<i64: 2, 1>}]} {
    %c0 = arith.constant 0 : index
    %c0_0 = arith.constant 0 : index
    %0 = vector.load %arg1[%c0, %c0_0] : memref<32x1024xbf16, #tpu.memory_space<vmem>>, vector<32x1024xbf16>
    %c0_1 = arith.constant 0 : index
    %c0_2 = arith.constant 0 : index
    %1 = vector.load %arg2[%c0_1, %c0_2] : memref<1024x128xbf16, #tpu.memory_space<vmem>>, vector<1024x128xbf16>
    %cst = arith.constant dense<0.000000e+00> : vector<32x128xf32>
    %2 = tpu.matmul %0, %1, %cst {dimension_numbers = #tpu.dot_dimension_numbers<[1], [0], [0], [1], [0, 0, 1, 1], [], []>} : vector<32x1024xbf16>, vector<1024x128xbf16>, vector<32x128xf32> -> vector<32x128xf32>
    %c0_3 = arith.constant 0 : index
    %c0_4 = arith.constant 0 : index
    %3 = vector.load %arg3[%c0_3, %c0_4] : memref<1x128xf32, #tpu.memory_space<vmem>>, vector<1x128xf32>
    %4 = vector.broadcast %3 : vector<1x128xf32> to vector<32x128xf32>
    %5 = arith.mulf %2, %4 : vector<32x128xf32>
    %c0_5 = arith.constant 0 : index
    %c0_6 = arith.constant 0 : index
    %6 = vector.load %arg4[%c0_5, %c0_6] : memref<1x128xf32, #tpu.memory_space<vmem>>, vector<1x128xf32>
    %7 = vector.broadcast %6 : vector<1x128xf32> to vector<32x128xf32>
    %8 = arith.addf %5, %7 : vector<32x128xf32>
    %cst_7 = arith.constant 0.000000e+00 : f32
    %9 = vector.broadcast %cst_7 : f32 to vector<32x128xf32>
    %10 = arith.cmpf oge, %8, %9 : vector<32x128xf32>
    %cst_8 = arith.constant 2.000000e-01 : f32
    %11 = vector.broadcast %cst_8 : f32 to vector<32x128xf32>
    %12 = arith.mulf %11, %8 : vector<32x128xf32>
    %13 = arith.select %10, %8, %12 : vector<32x128xi1>, vector<32x128xf32>
    %14 = vector.shape_cast %13 : vector<32x128xf32> to vector<2x16x128xf32>
    %c0_9 = arith.constant 0 : index
    %c0_10 = arith.constant 0 : index
    %15 = vector.load %arg5[%c0_9, %c0_10] : memref<16x128xf32, #tpu.memory_space<vmem>>, vector<16x128xf32>
    %16 = vector.shape_cast %15 : vector<16x128xf32> to vector<1x16x128xf32>
    %17 = vector.broadcast %16 : vector<1x16x128xf32> to vector<2x16x128xf32>
    %18 = arith.mulf %14, %17 : vector<2x16x128xf32>
    %cst_11 = arith.constant dense<0.000000e+00> : vector<2x16xf32>
    %19 = vector.multi_reduction <add>, %18, %cst_11 [2] : vector<2x16x128xf32> to vector<2x16xf32>
    %cst_12 = arith.constant dense<0.000000e+00> : vector<2xf32>
    %20 = vector.multi_reduction <add>, %19, %cst_12 [1] : vector<2x16xf32> to vector<2xf32>
    %21 = vector.shape_cast %20 : vector<2xf32> to vector<2x1xf32>
    %c0_13 = arith.constant 0 : index
    %c0_14 = arith.constant 0 : index
    %22 = vector.load %arg6[%c0_13, %c0_14] : memref<1x1xf32, #tpu.memory_space<vmem>>, vector<1x1xf32>
    %23 = vector.broadcast %22 : vector<1x1xf32> to vector<2x1xf32>
    %24 = arith.addf %21, %23 : vector<2x1xf32>
    %25 = arith.negf %24 : vector<2x1xf32>
    %26 = math.exp %25 : vector<2x1xf32>
    %cst_15 = arith.constant 1.000000e+00 : f32
    %27 = vector.broadcast %cst_15 : f32 to vector<2x1xf32>
    %28 = arith.addf %27, %26 : vector<2x1xf32>
    %29 = arith.divf %27, %28 : vector<2x1xf32>
    %c0_16 = arith.constant 0 : index
    %c0_17 = arith.constant 0 : index
    %30 = vector.load %arg7[%c0_16, %c0_17] : memref<2x1xf32, #tpu.memory_space<vmem>>, vector<2x1xf32>
    tpu.vector_store %arg7[%c0_16, %c0_17], %29 {strides = array<i32>} : memref<2x1xf32, #tpu.memory_space<vmem>>, vector<2x1xf32>,
    return
  }
  func.func @transform_0(%arg0: i32) -> (i32, i32) {
    %c0_i32 = arith.constant 0 : i32
    %c0_i32_0 = arith.constant 0 : i32
    return %arg0, %c0_i32 : i32, i32
  }
  func.func @transform_1(%arg0: i32) -> (i32, i32) {
    %c0_i32 = arith.constant 0 : i32
    %c0_i32_0 = arith.constant 0 : i32
    %c0_i32_1 = arith.constant 0 : i32
    return %c0_i32, %c0_i32_0 : i32, i32
  }
  func.func @transform_2(%arg0: i32) -> (i32, i32) {
    %c0_i32 = arith.constant 0 : i32
    %c0_i32_0 = arith.constant 0 : i32
    %c0_i32_1 = arith.constant 0 : i32
    return %c0_i32, %c0_i32_0 : i32, i32
  }
  func.func @transform_3(%arg0: i32) -> (i32, i32) {
    %c0_i32 = arith.constant 0 : i32
    %c0_i32_0 = arith.constant 0 : i32
    %c0_i32_1 = arith.constant 0 : i32
    return %c0_i32, %c0_i32_0 : i32, i32
  }
  func.func @transform_4(%arg0: i32) -> (i32, i32) {
    %c0_i32 = arith.constant 0 : i32
    %c0_i32_0 = arith.constant 0 : i32
    %c0_i32_1 = arith.constant 0 : i32
    return %c0_i32, %c0_i32_0 : i32, i32
  }
  func.func @transform_5(%arg0: i32) -> (i32, i32) {
    %c0_i32 = arith.constant 0 : i32
    %c0_i32_0 = arith.constant 0 : i32
    %c0_i32_1 = arith.constant 0 : i32
    return %c0_i32, %c0_i32_0 : i32, i32
  }
  func.func @transform_6(%arg0: i32) -> (i32, i32) {
    %c0_i32 = arith.constant 0 : i32
    %c0_i32_0 = arith.constant 0 : i32
    return %arg0, %c0_i32 : i32, i32
  }
}

</mosaic_0001>

<llo_original>
// kernel: discriminator_forward.3
$region0: #{discriminator_forward.3}
  #allocation0 [shape = 'u32[]', space=smem, size = 0x4, offset = 0x4, fixed_abs, tag = 'smem constant byte address 0x4 - core index']
  #allocation1 [shape = 'u32[144,128]{1,0:T(1,128)}', space=vmem, size = 0x12000, scoped, tag = 'internal scratch']
  %s0 = inlined_call_operand.vmem [shape: bf16[16,512], index: 0, kind: input, shape index: {}]
  %s1 = inlined_call_operand.vmem [shape: bf16[16,16], index: 1, kind: input, shape index: {}]
  %s2 = inlined_call_operand.vmem [shape: f32[16,1], index: 2, kind: input, shape index: {}]
  %s3 = inlined_call_operand.vmem [shape: f32[16,1], index: 3, kind: input, shape index: {}]
  %s4 = inlined_call_operand.vmem [shape: bf16[16,512], index: 4, kind: output, shape index: {}]
  %s5 = sld [smem:[#allocation0]]
  $region26: #{discriminator_forward.3} parent=0
    _
  %s7 = ssub.s32 1, %s5
  %s8 = scalar_select 0, %s7, %s5
  // Predicated region
  $region2: #{discriminator_forward.3} parent=0 // pred_check
    _
  $region3: #{discriminator_forward.3} parent=0 // pred_check_branch
    %10 = sbr.rel (0) target = $region5
  $region4: #{discriminator_forward.3} parent=0 // pred_region
    _
  $region5: #{discriminator_forward.3} parent=0 // pred_fallthru
    _
  // Predicated region
  $region6: #{discriminator_forward.3} parent=0 // pred_check
    _
  $region7: #{discriminator_forward.3} parent=0 // pred_check_branch
    %12 = sbr.rel (0) target = $region9
  $region8: #{discriminator_forward.3} parent=0 // pred_region
    _
  $region9: #{discriminator_forward.3} parent=0 // pred_fallthru
    _
  // Predicated region
  $region10: #{discriminator_forward.3} parent=0 // pred_check
    _
  $region11: #{discriminator_forward.3} parent=0 // pred_check_branch
    %14 = sbr.rel (0) target = $region13
  $region12: #{discriminator_forward.3} parent=0 // pred_region
    _
  $region13: #{discriminator_forward.3} parent=0 // pred_fallthru
    _
  // Predicated region
  $region14: #{discriminator_forward.3} parent=0 // pred_check
    _
  $region15: #{discriminator_forward.3} parent=0 // pred_check_branch
    %16 = sbr.rel (0) target = $region17
  $region16: #{discriminator_forward.3} parent=0 // pred_region
    _
  $region17: #{discriminator_forward.3} parent=0 // pred_fallthru
    _
  %v18 = vld [vmem:[%s1] sm:$0xf]
  %v19 = vld [vmem:[%s1 + $0x4] sm:$0xf]
  %v20 = vld [vmem:[%s0] sm:$0xff]
  %v21 = vld [vmem:[%s0 + $0x8] sm:$0xff]
  %v22 = vld [vmem:[%s0 + $0x10] sm:$0xff]
  %v23 = vld [vmem:[%s0 + $0x18] sm:$0xff]
  %v26 = vunpack.c.l.b16 %v18
  %v27 = vunpack.c.l.b16 %v19
  %v28 = vpack.c.b16 %v27, %v26
  %v33 = vunpack.c.l.b16 %v20
  %v34 = vunpack.c.h.b16 %v20
  %v35 = vunpack.c.l.b16 %v21
  %v36 = vunpack.c.h.b16 %v21
  %v37 = vunpack.c.l.b16 %v22
  %v38 = vunpack.c.h.b16 %v22
  %v39 = vunpack.c.l.b16 %v23
  %v40 = vunpack.c.h.b16 %v23
  %v41 = vpack.c.b16 %v37, %v33
  %v42 = vpack.c.b16 %v38, %v34
  %v43 = vpack.c.b16 %v39, %v35
  %v44 = vpack.c.b16 %v40, %v36
  %vm49 = vcmask 130048
  %v51 = vsel %vm49, %v28, 0
  %53 = vmatprep.subr.bf16.mxu0 0
  %54 = vmatpush1.bf16.msra.mxu0 0
  %55 = vmatprep.subr.bf16.mxu0 0
  %56 = vmatpush1.bf16.msra.mxu0 0
  %57 = vmatprep.subr.bf16.mxu0 0
  %58 = vmatpush1.bf16.msra.mxu0 0
  %59 = vmatprep.subr.bf16.mxu0 0
  %60 = vmatpush1.bf16.msra.mxu0 0
  %61 = vmatprep.subr.bf16.mxu0 0
  %62 = vmatpush1.bf16.msra.mxu0 0
  %63 = vmatprep.subr.bf16.mxu0 0
  %64 = vmatpush1.bf16.msra.mxu0 0
  %65 = vmatprep.subr.bf16.mxu0 0
  %66 = vmatpush1.bf16.msra.mxu0 0
  %67 = vmatprep.subr.bf16.mxu0 %v42
  %68 = vmatpush1.bf16.msra.mxu0 %v41
  %69 = vmatprep.subr.bf16.mxu0 0
  %70 = vmatpush2.bf16.msra.mxu0 0
  %71 = vmatprep.subr.bf16.mxu0 0
  %72 = vmatpush2.bf16.msra.mxu0 0
  %73 = vmatprep.subr.bf16.mxu0 0
  %74 = vmatpush2.bf16.msra.mxu0 0
  %75 = vmatprep.subr.bf16.mxu0 0
  %76 = vmatpush2.bf16.msra.mxu0 0
  %77 = vmatprep.subr.bf16.mxu0 0
  %78 = vmatpush2.bf16.msra.mxu0 0
  %79 = vmatprep.subr.bf16.mxu0 0
  %80 = vmatpush2.bf16.msra.mxu0 0
  %81 = vmatprep.subr.bf16.mxu0 0
  %82 = vmatpush2.bf16.msra.mxu0 0
  %83 = vmatprep.subr.bf16.mxu0 0
  %84 = vmatpush2.bf16.msra.mxu0 0
  %85 = vmatprep.mubr.bf16.mxu0 0
  %86 = vmatmul.mubr.bf16.gmra.mxu0 %v51
  %v87 = vpop.f32.mrf.mxu0
  %v88 = vadd.f32 0.0, %v87
  %v89 = vpop.f32.mrf.mxu0
  %v90 = vadd.f32 0.0, %v89
  %v91 = vpop.f32.mrf.mxu0
  %v92 = vadd.f32 0.0, %v91
  %v93 = vpop.f32.mrf.mxu0
  %v94 = vadd.f32 0.0, %v93
  %95 = vdwg.mxu0
  %96 = vmatprep.subr.bf16.mxu0 0
  %97 = vmatpush1.bf16.msra.mxu0 0
  %98 = vmatprep.subr.bf16.mxu0 0
  %99 = vmatpush1.bf16.msra.mxu0 0
  %100 = vmatprep.subr.bf16.mxu0 0
  %101 = vmatpush1.bf16.msra.mxu0 0
  %102 = vmatprep.subr.bf16.mxu0 0
  %103 = vmatpush1.bf16.msra.mxu0 0
  %104 = vmatprep.subr.bf16.mxu0 0
  %105 = vmatpush1.bf16.msra.mxu0 0
  %106 = vmatprep.subr.bf16.mxu0 0
  %107 = vmatpush1.bf16.msra.mxu0 0
  %108 = vmatprep.subr.bf16.mxu0 0
  %109 = vmatpush1.bf16.msra.mxu0 0
  %110 = vmatprep.subr.bf16.mxu0 %v44
  %111 = vmatpush1.bf16.msra.mxu0 %v43
  %112 = vmatprep.subr.bf16.mxu0 0
  %113 = vmatpush2.bf16.msra.mxu0 0
  %114 = vmatprep.subr.bf16.mxu0 0
  %115 = vmatpush2.bf16.msra.mxu0 0
  %116 = vmatprep.subr.bf16.mxu0 0
  %117 = vmatpush2.bf16.msra.mxu0 0
  %118 = vmatprep.subr.bf16.mxu0 0
  %119 = vmatpush2.bf16.msra.mxu0 0
  %120 = vmatprep.subr.bf16.mxu0 0
  %121 = vmatpush2.bf16.msra.mxu0 0
  %122 = vmatprep.subr.bf16.mxu0 0
  %123 = vmatpush2.bf16.msra.mxu0 0
  %124 = vmatprep.subr.bf16.mxu0 0
  %125 = vmatpush2.bf16.msra.mxu0 0
  %126 = vmatprep.subr.bf16.mxu0 0
  %127 = vmatpush2.bf16.msra.mxu0 0
  %128 = vmatprep.mubr.bf16.mxu0 0
  %129 = vmatmul.mubr.bf16.gmra.mxu0 %v51
  %v130 = vpop.f32.mrf.mxu0
  %v131 = vadd.f32 0.0, %v130
  %v132 = vpop.f32.mrf.mxu0
  %v133 = vadd.f32 0.0, %v132
  %v134 = vpop.f32.mrf.mxu0
  %v135 = vadd.f32 0.0, %v134
  %v136 = vpop.f32.mrf.mxu0
  %v137 = vadd.f32 0.0, %v136
  %138 = vdwg.mxu0
  %v139 = vld [vmem:[%s2] sm:$0xff]
  %v140 = vld [vmem:[%s2 + $0x8] sm:$0xff]
  %142 = vset.pattern.permute.xlu0 0
  %143 = vperm.xlu0 %142, %v139
  %v144 = vpop.permute.xlu0 %143
  %147 = vset.pattern.permute.xlu0 0
  %148 = vperm.xlu0 %147, %v140
  %v149 = vpop.permute.xlu0 %148
  %v151 = vmul.f32 %v88, %v144
  %v152 = vmul.f32 %v90, %v144
  %v153 = vmul.f32 %v131, %v144
  %v154 = vmul.f32 %v133, %v144
  %v155 = vmul.f32 %v92, %v149
  %v156 = vmul.f32 %v94, %v149
  %v157 = vmul.f32 %v135, %v149
  %v158 = vmul.f32 %v137, %v149
  %v159 = vld [vmem:[%s3] sm:$0xff]
  %v160 = vld [vmem:[%s3 + $0x8] sm:$0xff]
  %162 = vset.pattern.permute.xlu0 0
  %163 = vperm.xlu0 %162, %v159
  %v164 = vpop.permute.xlu0 %163
  %167 = vset.pattern.permute.xlu0 0
  %168 = vperm.xlu0 %167, %v160
  %v169 = vpop.permute.xlu0 %168
  %v171 = vadd.f32 %v151, %v164
  %v172 = vadd.f32 %v152, %v164
  %v173 = vadd.f32 %v153, %v164
  %v174 = vadd.f32 %v154, %v164
  %v175 = vadd.f32 %v155, %v169
  %v176 = vadd.f32 %v156, %v169
  %v177 = vadd.f32 %v157, %v169
  %v178 = vadd.f32 %v158, %v169
  %vm179 = vcmp.ge.f32.partialorder %v171, 0.0
  %vm180 = vcmp.ge.f32.partialorder %v172, 0.0
  %vm181 = vcmp.ge.f32.partialorder %v173, 0.0
  %vm182 = vcmp.ge.f32.partialorder %v174, 0.0
  %vm183 = vcmp.ge.f32.partialorder %v175, 0.0
  %vm184 = vcmp.ge.f32.partialorder %v176, 0.0
  %vm185 = vcmp.ge.f32.partialorder %v177, 0.0
  %vm186 = vcmp.ge.f32.partialorder %v178, 0.0
  %v187 = vmul.f32 %v171, 0.2
  %v188 = vmul.f32 %v172, 0.2
  %v189 = vmul.f32 %v173, 0.2
  %v190 = vmul.f32 %v174, 0.2
  %v191 = vmul.f32 %v175, 0.2
  %v192 = vmul.f32 %v176, 0.2
  %v193 = vmul.f32 %v177, 0.2
  %v194 = vmul.f32 %v178, 0.2
  %v195 = vsel %vm179, %v171, %v187
  %v196 = vsel %vm180, %v172, %v188
  %v197 = vsel %vm181, %v173, %v189
  %v198 = vsel %vm182, %v174, %v190
  %v199 = vsel %vm183, %v175, %v191
  %v200 = vsel %vm184, %v176, %v192
  %v201 = vsel %vm185, %v177, %v193
  %v202 = vsel %vm186, %v178, %v194
  %v203 = vpack.c.bf16 %v199, %v195
  %v204 = vpack.c.bf16 %v200, %v196
  %v205 = vpack.c.bf16 %v201, %v197
  %v206 = vpack.c.bf16 %v202, %v198
  %v211 = vunpack.c.l.b16 %v203
  %v212 = vunpack.c.l.b16 %v204
  %v213 = vunpack.c.l.b16 %v205
  %v214 = vunpack.c.l.b16 %v206
  %v215 = vunpack.c.h.b16 %v203
  %v216 = vunpack.c.h.b16 %v204
  %v217 = vunpack.c.h.b16 %v205
  %v218 = vunpack.c.h.b16 %v206
  %v219 = vpack.c.b16 %v212, %v211
  %v220 = vpack.c.b16 %v214, %v213
  %v221 = vpack.c.b16 %v216, %v215
  %v222 = vpack.c.b16 %v218, %v217
  %227 = vst [vmem:[%s4] sm:$0xff] %v219
  %228 = vst [vmem:[%s4 + $0x8] sm:$0xff] %v220
  %229 = vst [vmem:[%s4 + $0x10] sm:$0xff] %v221
  %230 = vst [vmem:[%s4 + $0x18] sm:$0xff] %v222
  // Predicated region
  $region18: #{discriminator_forward.3} parent=0 // pred_check
    _
  $region19: #{discriminator_forward.3} parent=0 // pred_check_branch
    %232 = sbr.rel (0) target = $region21
  $region20: #{discriminator_forward.3} parent=0 // pred_region
    _
  $region21: #{discriminator_forward.3} parent=0 // pred_fallthru
    _
  // Predicated region
  $region22: #{discriminator_forward.3} parent=0 // pred_check
    _
  $region23: #{discriminator_forward.3} parent=0 // pred_check_branch
    %234 = sbr.rel (0) target = $region25
  $region24: #{discriminator_forward.3} parent=0 // pred_region
    _
  $region25: #{discriminator_forward.3} parent=0 // pred_fallthru
    _

// kernel: discriminator_forward.4
$region0: #{discriminator_forward.4}
  #allocation0 [shape = 'u32[]', space=smem, size = 0x4, offset = 0x4, fixed_abs, tag = 'smem constant byte address 0x4 - core index']
  #allocation1 [shape = 'u32[144,128]{1,0:T(1,128)}', space=vmem, size = 0x12000, scoped, tag = 'internal scratch']
  %s0 = inlined_call_operand.vmem [shape: bf16[128,256], index: 0, kind: input, shape index: {}]
  %s1 = inlined_call_operand.vmem [shape: bf16[256,64], index: 1, kind: input, shape index: {}]
  %s2 = inlined_call_operand.vmem [shape: f32[1,64], index: 2, kind: input, shape index: {}]
  %s3 = inlined_call_operand.vmem [shape: f32[1,64], index: 3, kind: input, shape index: {}]
  %s4 = inlined_call_operand.vmem [shape: bf16[128,64], index: 4, kind: output, shape index: {}]
  %s5 = sld [smem:[#allocation0]]
  $region26: #{discriminator_forward.4} parent=0
    _
  %s7 = ssub.s32 1, %s5
  %s8 = scalar_select 0, %s7, %s5
  // Predicated region
  $region2: #{discriminator_forward.4} parent=0 // pred_check
    _
  $region3: #{discriminator_forward.4} parent=0 // pred_check_branch
    %10 = sbr.rel (0) target = $region5
  $region4: #{discriminator_forward.4} parent=0 // pred_region
    _
  $region5: #{discriminator_forward.4} parent=0 // pred_fallthru
    _
  // Predicated region
  $region6: #{discriminator_forward.4} parent=0 // pred_check
    _
  $region7: #{discriminator_forward.4} parent=0 // pred_check_branch
    %12 = sbr.rel (0) target = $region9
  $region8: #{discriminator_forward.4} parent=0 // pred_region
    _
  $region9: #{discriminator_forward.4} parent=0 // pred_fallthru
    _
  // Predicated region
  $region10: #{discriminator_forward.4} parent=0 // pred_check
    _
  $region11: #{discriminator_forward.4} parent=0 // pred_check_branch
    %14 = sbr.rel (0) target = $region13
  $region12: #{discriminator_forward.4} parent=0 // pred_region
    _
  $region13: #{discriminator_forward.4} parent=0 // pred_fallthru
    _
  // Predicated region
  $region14: #{discriminator_forward.4} parent=0 // pred_check
    _
  $region15: #{discriminator_forward.4} parent=0 // pred_check_branch
    %16 = sbr.rel (0) target = $region17
  $region16: #{discriminator_forward.4} parent=0 // pred_region
    _
  $region17: #{discriminator_forward.4} parent=0 // pred_fallthru
    _
  %v18 = vld [vmem:[%s0] sm:$0xff]
  %v19 = vld [vmem:[%s0 + $0x8] sm:$0xff]
  %v20 = vld [vmem:[%s0 + $0x10] sm:$0xff]
  %v21 = vld [vmem:[%s0 + $0x18] sm:$0xff]
  %v22 = vld [vmem:[%s0 + $0x20] sm:$0xff]
  %v23 = vld [vmem:[%s0 + $0x28] sm:$0xff]
  %v24 = vld [vmem:[%s0 + $0x30] sm:$0xff]
  %v25 = vld [vmem:[%s0 + $0x38] sm:$0xff]
  %v26 = vld [vmem:[%s0 + $0x40] sm:$0xff]
  %v27 = vld [vmem:[%s0 + $0x48] sm:$0xff]
  %v28 = vld [vmem:[%s0 + $0x50] sm:$0xff]
  %v29 = vld [vmem:[%s0 + $0x58] sm:$0xff]
  %v30 = vld [vmem:[%s0 + $0x60] sm:$0xff]
  %v31 = vld [vmem:[%s0 + $0x68] sm:$0xff]
  %v32 = vld [vmem:[%s0 + $0x70] sm:$0xff]
  %v33 = vld [vmem:[%s0 + $0x78] sm:$0xff]
  %v34 = vld [vmem:[%s1] sm:$0xf]
  %v35 = vld [vmem:[%s1 + $0x4] sm:$0xf]
  %v36 = vld [vmem:[%s1 + $0x8] sm:$0xf]
  %v37 = vld [vmem:[%s1 + $0xc] sm:$0xf]
  %v38 = vld [vmem:[%s1 + $0x10] sm:$0xf]
  %v39 = vld [vmem:[%s1 + $0x14] sm:$0xf]
  %v40 = vld [vmem:[%s1 + $0x18] sm:$0xf]
  %v41 = vld [vmem:[%s1 + $0x1c] sm:$0xf]
  %v42 = vld [vmem:[%s1 + $0x20] sm:$0xf]
  %v43 = vld [vmem:[%s1 + $0x24] sm:$0xf]
  %v44 = vld [vmem:[%s1 + $0x28] sm:$0xf]
  %v45 = vld [vmem:[%s1 + $0x2c] sm:$0xf]
  %v46 = vld [vmem:[%s1 + $0x30] sm:$0xf]
  %v47 = vld [vmem:[%s1 + $0x34] sm:$0xf]
  %v48 = vld [vmem:[%s1 + $0x38] sm:$0xf]
  %v49 = vld [vmem:[%s1 + $0x3c] sm:$0xf]
  %v50 = vld [vmem:[%s1 + $0x40] sm:$0xf]
  %v51 = vld [vmem:[%s1 + $0x44] sm:$0xf]
  %v52 = vld [vmem:[%s1 + $0x48] sm:$0xf]
  %v53 = vld [vmem:[%s1 + $0x4c] sm:$0xf]
  %v54 = vld [vmem:[%s1 + $0x50] sm:$0xf]
  %v55 = vld [vmem:[%s1 + $0x54] sm:$0xf]
  %v56 = vld [vmem:[%s1 + $0x58] sm:$0xf]
  %v57 = vld [vmem:[%s1 + $0x5c] sm:$0xf]
  %v58 = vld [vmem:[%s1 + $0x60] sm:$0xf]
  %v59 = vld [vmem:[%s1 + $0x64] sm:$0xf]
  %v60 = vld [vmem:[%s1 + $0x68] sm:$0xf]
  %v61 = vld [vmem:[%s1 + $0x6c] sm:$0xf]
  %v62 = vld [vmem:[%s1 + $0x70] sm:$0xf]
  %v63 = vld [vmem:[%s1 + $0x74] sm:$0xf]
  %v64 = vld [vmem:[%s1 + $0x78] sm:$0xf]
  %v65 = vld [vmem:[%s1 + $0x7c] sm:$0xf]
  %v82 = vunpack.c.l.b16 %v18
  %v83 = vunpack.c.h.b16 %v18
  %v84 = vunpack.c.l.b16 %v19
  %v85 = vunpack.c.h.b16 %v19
  %v86 = vunpack.c.l.b16 %v20
  %v87 = vunpack.c.h.b16 %v20
  %v88 = vunpack.c.l.b16 %v21
  %v89 = vunpack.c.h.b16 %v21
  %v90 = vunpack.c.l.b16 %v22
  %v91 = vunpack.c.h.b16 %v22
  %v92 = vunpack.c.l.b16 %v23
  %v93 = vunpack.c.h.b16 %v23
  %v94 = vunpack.c.l.b16 %v24
  %v95 = vunpack.c.h.b16 %v24
  %v96 = vunpack.c.l.b16 %v25
  %v97 = vunpack.c.h.b16 %v25
  %v98 = vunpack.c.l.b16 %v26
  %v99 = vunpack.c.h.b16 %v26
  %v100 = vunpack.c.l.b16 %v27
  %v101 = vunpack.c.h.b16 %v27
  %v102 = vunpack.c.l.b16 %v28
  %v103 = vunpack.c.h.b16 %v28
  %v104 = vunpack.c.l.b16 %v29
  %v105 = vunpack.c.h.b16 %v29
  %v106 = vunpack.c.l.b16 %v30
  %v107 = vunpack.c.h.b16 %v30
  %v108 = vunpack.c.l.b16 %v31
  %v109 = vunpack.c.h.b16 %v31
  %v110 = vunpack.c.l.b16 %v32
  %v111 = vunpack.c.h.b16 %v32
  %v112 = vunpack.c.l.b16 %v33
  %v113 = vunpack.c.h.b16 %v33
  %v114 = vpack.c.b16 %v84, %v82
  %v115 = vpack.c.b16 %v85, %v83
  %v116 = vpack.c.b16 %v88, %v86
  %v117 = vpack.c.b16 %v89, %v87
  %v118 = vpack.c.b16 %v92, %v90
  %v119 = vpack.c.b16 %v93, %v91
  %v120 = vpack.c.b16 %v96, %v94
  %v121 = vpack.c.b16 %v97, %v95
  %v122 = vpack.c.b16 %v100, %v98
  %v123 = vpack.c.b16 %v101, %v99
  %v124 = vpack.c.b16 %v104, %v102
  %v125 = vpack.c.b16 %v105, %v103
  %v126 = vpack.c.b16 %v108, %v106
  %v127 = vpack.c.b16 %v109, %v107
  %v128 = vpack.c.b16 %v112, %v110
  %v129 = vpack.c.b16 %v113, %v111
  %v178 = vunpack.c.l.b16 %v34
  %v179 = vunpack.c.l.b16 %v35
  %v180 = vunpack.c.l.b16 %v36
  %v181 = vunpack.c.l.b16 %v37
  %v182 = vunpack.c.l.b16 %v38
  %v183 = vunpack.c.l.b16 %v39
  %v184 = vunpack.c.l.b16 %v40
  %v185 = vunpack.c.l.b16 %v41
  %v186 = vunpack.c.l.b16 %v42
  %v187 = vunpack.c.l.b16 %v43
  %v188 = vunpack.c.l.b16 %v44
  %v189 = vunpack.c.l.b16 %v45
  %v190 = vunpack.c.l.b16 %v46
  %v191 = vunpack.c.l.b16 %v47
  %v192 = vunpack.c.l.b16 %v48
  %v193 = vunpack.c.l.b16 %v49
  %v194 = vunpack.c.l.b16 %v50
  %v195 = vunpack.c.l.b16 %v51
  %v196 = vunpack.c.l.b16 %v52
  %v197 = vunpack.c.l.b16 %v53
  %v198 = vunpack.c.l.b16 %v54
  %v199 = vunpack.c.l.b16 %v55
  %v200 = vunpack.c.l.b16 %v56
  %v201 = vunpack.c.l.b16 %v57
  %v202 = vunpack.c.l.b16 %v58
  %v203 = vunpack.c.l.b16 %v59
  %v204 = vunpack.c.l.b16 %v60
  %v205 = vunpack.c.l.b16 %v61
  %v206 = vunpack.c.l.b16 %v62
  %v207 = vunpack.c.l.b16 %v63
  %v208 = vunpack.c.l.b16 %v64
  %v209 = vunpack.c.l.b16 %v65
  %v210 = vpack.c.b16 %v179, %v178
  %v211 = vpack.c.b16 %v181, %v180
  %v212 = vpack.c.b16 %v183, %v182
  %v213 = vpack.c.b16 %v185, %v184
  %v214 = vpack.c.b16 %v187, %v186
  %v215 = vpack.c.b16 %v189, %v188
  %v216 = vpack.c.b16 %v191, %v190
  %v217 = vpack.c.b16 %v193, %v192
  %v218 = vpack.c.b16 %v195, %v194
  %v219 = vpack.c.b16 %v197, %v196
  %v220 = vpack.c.b16 %v199, %v198
  %v221 = vpack.c.b16 %v201, %v200
  %v222 = vpack.c.b16 %v203, %v202
  %v223 = vpack.c.b16 %v205, %v204
  %v224 = vpack.c.b16 %v207, %v206
  %v225 = vpack.c.b16 %v209, %v208
  %242 = vmatprep.subr.bf16.mxu0 0
  %243 = vmatpush1.bf16.msra.mxu0 %v217
  %244 = vmatprep.subr.bf16.mxu0 0
  %245 = vmatpush1.bf16.msra.mxu0 %v216
  %246 = vmatprep.subr.bf16.mxu0 0
  %247 = vmatpush1.bf16.msra.mxu0 %v215
  %248 = vmatprep.subr.bf16.mxu0 0
  %249 = vmatpush1.bf16.msra.mxu0 %v214
  %250 = vmatprep.subr.bf16.mxu0 0
  %251 = vmatpush1.bf16.msra.mxu0 %v213
  %252 = vmatprep.subr.bf16.mxu0 0
  %253 = vmatpush1.bf16.msra.mxu0 %v212
  %254 = vmatprep.subr.bf16.mxu0 0
  %255 = vmatpush1.bf16.msra.mxu0 %v211
  %256 = vmatprep.subr.bf16.mxu0 0
  %257 = vmatpush1.bf16.msra.mxu0 %v210
  %258 = vmatprep.subr.bf16.mxu0 0
  %259 = vmatpush2.bf16.msra.mxu0 %v225
  %260 = vmatprep.subr.bf16.mxu0 0
  %261 = vmatpush2.bf16.msra.mxu0 %v224
  %262 = vmatprep.subr.bf16.mxu0 0
  %263 = vmatpush2.bf16.msra.mxu0 %v223
  %264 = vmatprep.subr.bf16.mxu0 0
  %265 = vmatpush2.bf16.msra.mxu0 %v222
  %266 = vmatprep.subr.bf16.mxu0 0
  %267 = vmatpush2.bf16.msra.mxu0 %v221
  %268 = vmatprep.subr.bf16.mxu0 0
  %269 = vmatpush2.bf16.msra.mxu0 %v220
  %270 = vmatprep.subr.bf16.mxu0 0
  %271 = vmatpush2.bf16.msra.mxu0 %v219
  %272 = vmatprep.subr.bf16.mxu0 0
  %273 = vmatpush2.bf16.msra.mxu0 %v218
  %274 = vmatprep.mubr.bf16.mxu0 %v115
  %275 = vmatmul.mubr.bf16.gmra.mxu0 %v114
  %v276 = vpop.f32.mrf.mxu0
  %v277 = vadd.f32 0.0, %v276
  %v278 = vpop.f32.mrf.mxu0
  %v279 = vpop.f32.mrf.mxu0
  %v280 = vadd.f32 0.0, %v279
  %v281 = vpop.f32.mrf.mxu0
  %282 = vmatprep.mubr.bf16.mxu0 %v117
  %283 = vmatmul.mubr.bf16.gmra.mxu0 %v116
  %v284 = vpop.f32.mrf.mxu0
  %v285 = vadd.f32 0.0, %v284
  %v286 = vpop.f32.mrf.mxu0
  %v287 = vpop.f32.mrf.mxu0
  %v288 = vadd.f32 0.0, %v287
  %v289 = vpop.f32.mrf.mxu0
  %290 = vmatprep.mubr.bf16.mxu0 %v119
  %291 = vmatmul.mubr.bf16.gmra.mxu0 %v118
  %v292 = vpop.f32.mrf.mxu0
  %v293 = vadd.f32 0.0, %v292
  %v294 = vpop.f32.mrf.mxu0
  %v295 = vpop.f32.mrf.mxu0
  %v296 = vadd.f32 0.0, %v295
  %v297 = vpop.f32.mrf.mxu0
  %298 = vmatprep.mubr.bf16.mxu0 %v121
  %299 = vmatmul.mubr.bf16.gmra.mxu0 %v120
  %v300 = vpop.f32.mrf.mxu0
  %v301 = vadd.f32 0.0, %v300
  %v302 = vpop.f32.mrf.mxu0
  %v303 = vpop.f32.mrf.mxu0
  %v304 = vadd.f32 0.0, %v303
  %v305 = vpop.f32.mrf.mxu0
  %306 = vmatprep.mubr.bf16.mxu0 %v123
  %307 = vmatmul.mubr.bf16.gmra.mxu0 %v122
  %v308 = vpop.f32.mrf.mxu0
  %v309 = vadd.f32 0.0, %v308
  %v310 = vpop.f32.mrf.mxu0
  %v311 = vpop.f32.mrf.mxu0
  %v312 = vadd.f32 0.0, %v311
  %v313 = vpop.f32.mrf.mxu0
  %314 = vmatprep.mubr.bf16.mxu0 %v125
  %315 = vmatmul.mubr.bf16.gmra.mxu0 %v124
  %v316 = vpop.f32.mrf.mxu0
  %v317 = vadd.f32 0.0, %v316
  %v318 = vpop.f32.mrf.mxu0
  %v319 = vpop.f32.mrf.mxu0
  %v320 = vadd.f32 0.0, %v319
  %v321 = vpop.f32.mrf.mxu0
  %322 = vmatprep.mubr.bf16.mxu0 %v127
  %323 = vmatmul.mubr.bf16.gmra.mxu0 %v126
  %v324 = vpop.f32.mrf.mxu0
  %v325 = vadd.f32 0.0, %v324
  %v326 = vpop.f32.mrf.mxu0
  %v327 = vpop.f32.mrf.mxu0
  %v328 = vadd.f32 0.0, %v327
  %v329 = vpop.f32.mrf.mxu0
  %330 = vmatprep.mubr.bf16.mxu0 %v129
  %331 = vmatmul.mubr.bf16.gmra.mxu0 %v128
  %v332 = vpop.f32.mrf.mxu0
  %v333 = vadd.f32 0.0, %v332
  %v334 = vpop.f32.mrf.mxu0
  %v335 = vpop.f32.mrf.mxu0
  %v336 = vadd.f32 0.0, %v335
  %v337 = vpop.f32.mrf.mxu0
  %338 = vdwg.mxu0
  %v339 = vld [vmem:[%s2] sm:$0x1]
  %v341 = vlaneseq
  %v342 = vshrl.u32 %v341, 7
  %v343 = vsub.s32 0, %v342
  %v344 = vrot.slane %v339, %v343
  %v346 = vmul.f32 %v277, %v344
  %v347 = vmul.f32 %v280, %v344
  %v348 = vmul.f32 %v285, %v344
  %v349 = vmul.f32 %v288, %v344
  %v350 = vmul.f32 %v293, %v344
  %v351 = vmul.f32 %v296, %v344
  %v352 = vmul.f32 %v301, %v344
  %v353 = vmul.f32 %v304, %v344
  %v354 = vmul.f32 %v309, %v344
  %v355 = vmul.f32 %v312, %v344
  %v356 = vmul.f32 %v317, %v344
  %v357 = vmul.f32 %v320, %v344
  %v358 = vmul.f32 %v325, %v344
  %v359 = vmul.f32 %v328, %v344
  %v360 = vmul.f32 %v333, %v344
  %v361 = vmul.f32 %v336, %v344
  %v362 = vld [vmem:[%s3] sm:$0x1]
  %v364 = vlaneseq
  %v365 = vshrl.u32 %v364, 7
  %v366 = vsub.s32 0, %v365
  %v367 = vrot.slane %v362, %v366
  %v369 = vadd.f32 %v346, %v367
  %v370 = vadd.f32 %v347, %v367
  %v371 = vadd.f32 %v348, %v367
  %v372 = vadd.f32 %v349, %v367
  %v373 = vadd.f32 %v350, %v367
  %v374 = vadd.f32 %v351, %v367
  %v375 = vadd.f32 %v352, %v367
  %v376 = vadd.f32 %v353, %v367
  %v377 = vadd.f32 %v354, %v367
  %v378 = vadd.f32 %v355, %v367
  %v379 = vadd.f32 %v356, %v367
  %v380 = vadd.f32 %v357, %v367
  %v381 = vadd.f32 %v358, %v367
  %v382 = vadd.f32 %v359, %v367
  %v383 = vadd.f32 %v360, %v367
  %v384 = vadd.f32 %v361, %v367
  %vm385 = vcmp.ge.f32.partialorder %v369, 0.0
  %vm386 = vcmp.ge.f32.partialorder %v370, 0.0
  %vm387 = vcmp.ge.f32.partialorder %v371, 0.0
  %vm388 = vcmp.ge.f32.partialorder %v372, 0.0
  %vm389 = vcmp.ge.f32.partialorder %v373, 0.0
  %vm390 = vcmp.ge.f32.partialorder %v374, 0.0
  %vm391 = vcmp.ge.f32.partialorder %v375, 0.0
  %vm392 = vcmp.ge.f32.partialorder %v376, 0.0
  %vm393 = vcmp.ge.f32.partialorder %v377, 0.0
  %vm394 = vcmp.ge.f32.partialorder %v378, 0.0
  %vm395 = vcmp.ge.f32.partialorder %v379, 0.0
  %vm396 = vcmp.ge.f32.partialorder %v380, 0.0
  %vm397 = vcmp.ge.f32.partialorder %v381, 0.0
  %vm398 = vcmp.ge.f32.partialorder %v382, 0.0
  %vm399 = vcmp.ge.f32.partialorder %v383, 0.0
  %vm400 = vcmp.ge.f32.partialorder %v384, 0.0
  %v401 = vmul.f32 %v369, 0.2
  %v402 = vmul.f32 %v370, 0.2
  %v403 = vmul.f32 %v371, 0.2
  %v404 = vmul.f32 %v372, 0.2
  %v405 = vmul.f32 %v373, 0.2
  %v406 = vmul.f32 %v374, 0.2
  %v407 = vmul.f32 %v375, 0.2
  %v408 = vmul.f32 %v376, 0.2
  %v409 = vmul.f32 %v377, 0.2
  %v410 = vmul.f32 %v378, 0.2
  %v411 = vmul.f32 %v379, 0.2
  %v412 = vmul.f32 %v380, 0.2
  %v413 = vmul.f32 %v381, 0.2
  %v414 = vmul.f32 %v382, 0.2
  %v415 = vmul.f32 %v383, 0.2
  %v416 = vmul.f32 %v384, 0.2
  %v417 = vsel %vm385, %v369, %v401
  %v418 = vsel %vm386, %v370, %v402
  %v419 = vsel %vm387, %v371, %v403
  %v420 = vsel %vm388, %v372, %v404
  %v421 = vsel %vm389, %v373, %v405
  %v422 = vsel %vm390, %v374, %v406
  %v423 = vsel %vm391, %v375, %v407
  %v424 = vsel %vm392, %v376, %v408
  %v425 = vsel %vm393, %v377, %v409
  %v426 = vsel %vm394, %v378, %v410
  %v427 = vsel %vm395, %v379, %v411
  %v428 = vsel %vm396, %v380, %v412
  %v429 = vsel %vm397, %v381, %v413
  %v430 = vsel %vm398, %v382, %v414
  %v431 = vsel %vm399, %v383, %v415
  %v432 = vsel %vm400, %v384, %v416
  %v433 = vpack.c.bf16 %v418, %v417
  %v434 = vpack.c.bf16 %v420, %v419
  %v435 = vpack.c.bf16 %v422, %v421
  %v436 = vpack.c.bf16 %v424, %v423
  %v437 = vpack.c.bf16 %v426, %v425
  %v438 = vpack.c.bf16 %v428, %v427
  %v439 = vpack.c.bf16 %v430, %v429
  %v440 = vpack.c.bf16 %v432, %v431
  %v449 = vunpack.c.l.b16 %v433
  %v450 = vunpack.c.h.b16 %v433
  %v451 = vunpack.c.l.b16 %v434
  %v452 = vunpack.c.h.b16 %v434
  %v453 = vunpack.c.l.b16 %v435
  %v454 = vunpack.c.h.b16 %v435
  %v455 = vunpack.c.l.b16 %v436
  %v456 = vunpack.c.h.b16 %v436
  %v457 = vunpack.c.l.b16 %v437
  %v458 = vunpack.c.h.b16 %v437
  %v459 = vunpack.c.l.b16 %v438
  %v460 = vunpack.c.h.b16 %v438
  %v461 = vunpack.c.l.b16 %v439
  %v462 = vunpack.c.h.b16 %v439
  %v463 = vunpack.c.l.b16 %v440
  %v464 = vunpack.c.h.b16 %v440
  %v465 = vpack.c.b16 %v449, %v449
  %v466 = vpack.c.b16 %v450, %v450
  %v467 = vpack.c.b16 %v451, %v451
  %v468 = vpack.c.b16 %v452, %v452
  %v469 = vpack.c.b16 %v453, %v453
  %v470 = vpack.c.b16 %v454, %v454
  %v471 = vpack.c.b16 %v455, %v455
  %v472 = vpack.c.b16 %v456, %v456
  %v473 = vpack.c.b16 %v457, %v457
  %v474 = vpack.c.b16 %v458, %v458
  %v475 = vpack.c.b16 %v459, %v459
  %v476 = vpack.c.b16 %v460, %v460
  %v477 = vpack.c.b16 %v461, %v461
  %v478 = vpack.c.b16 %v462, %v462
  %v479 = vpack.c.b16 %v463, %v463
  %v480 = vpack.c.b16 %v464, %v464
  %vm497 = vcmask 519168
  %498 = vst.msk [vmem:[%s4] sm:$0xf] %vm497, %v465
  %499 = vst.msk [vmem:[%s4 + $0x4] sm:$0xf] %vm497, %v466
  %500 = vst.msk [vmem:[%s4 + $0x8] sm:$0xf] %vm497, %v467
  %501 = vst.msk [vmem:[%s4 + $0xc] sm:$0xf] %vm497, %v468
  %502 = vst.msk [vmem:[%s4 + $0x10] sm:$0xf] %vm497, %v469
  %503 = vst.msk [vmem:[%s4 + $0x14] sm:$0xf] %vm497, %v470
  %504 = vst.msk [vmem:[%s4 + $0x18] sm:$0xf] %vm497, %v471
  %505 = vst.msk [vmem:[%s4 + $0x1c] sm:$0xf] %vm497, %v472
  %506 = vst.msk [vmem:[%s4 + $0x20] sm:$0xf] %vm497, %v473
  %507 = vst.msk [vmem:[%s4 + $0x24] sm:$0xf] %vm497, %v474
  %508 = vst.msk [vmem:[%s4 + $0x28] sm:$0xf] %vm497, %v475
  %509 = vst.msk [vmem:[%s4 + $0x2c] sm:$0xf] %vm497, %v476
  %510 = vst.msk [vmem:[%s4 + $0x30] sm:$0xf] %vm497, %v477
  %511 = vst.msk [vmem:[%s4 + $0x34] sm:$0xf] %vm497, %v478
  %512 = vst.msk [vmem:[%s4 + $0x38] sm:$0xf] %vm497, %v479
  %513 = vst.msk [vmem:[%s4 + $0x3c] sm:$0xf] %vm497, %v480
  // Predicated region
  $region18: #{discriminator_forward.4} parent=0 // pred_check
    _
  $region19: #{discriminator_forward.4} parent=0 // pred_check_branch
    %515 = sbr.rel (0) target = $region21
  $region20: #{discriminator_forward.4} parent=0 // pred_region
    _
  $region21: #{discriminator_forward.4} parent=0 // pred_fallthru
    _
  // Predicated region
  $region22: #{discriminator_forward.4} parent=0 // pred_check
    _
  $region23: #{discriminator_forward.4} parent=0 // pred_check_branch
    %517 = sbr.rel (0) target = $region25
  $region24: #{discriminator_forward.4} parent=0 // pred_region
    _
  $region25: #{discriminator_forward.4} parent=0 // pred_fallthru
    _

// kernel: discriminator_forward.5
$region0: #{discriminator_forward.5}
  #allocation0 [shape = 'u32[]', space=smem, size = 0x4, offset = 0x4, fixed_abs, tag = 'smem constant byte address 0x4 - core index']
  #allocation1 [shape = 'u32[144,128]{1,0:T(1,128)}', space=vmem, size = 0x12000, scoped, tag = 'internal scratch']
  #allocation2 [shape = 'f32[1,1]{1,0:T(1,128)S(1)}', space=vmem, size = 0x200, scoped, tag = 'scoped memory for discriminator_forward.5']
  %s0 = inlined_call_operand.vmem [shape: bf16[32,1024], index: 0, kind: input, shape index: {}]
  %s1 = inlined_call_operand.vmem [shape: bf16[1024,128], index: 1, kind: input, shape index: {}]
  %s2 = inlined_call_operand.vmem [shape: f32[1,128], index: 2, kind: input, shape index: {}]
  %s3 = inlined_call_operand.vmem [shape: f32[1,128], index: 3, kind: input, shape index: {}]
  %s4 = inlined_call_operand.vmem [shape: f32[16,128], index: 4, kind: input, shape index: {}]
  %s5 = inlined_call_operand.<no memory space> [shape: f32[1,1], index: 5, kind: input, shape index: {}]
  %s6 = inlined_call_operand.vmem [shape: f32[2,1], index: 6, kind: output, shape index: {}]
  %s7 = sld [smem:[#allocation0]]
  $region34: #{discriminator_forward.5} parent=0
    _
  %s9 = ssub.s32 1, %s7
  %s10 = scalar_select 0, %s9, %s7
  %v11 = vstv %s5
  %12 = vst [vmem:[#allocation2] sm:$0x1] %v11
  // Predicated region
  $region2: #{discriminator_forward.5} parent=0 // pred_check
    _
  $region3: #{discriminator_forward.5} parent=0 // pred_check_branch
    %14 = sbr.rel (0) target = $region5
  $region4: #{discriminator_forward.5} parent=0 // pred_region
    _
  $region5: #{discriminator_forward.5} parent=0 // pred_fallthru
    _
  // Predicated region
  $region6: #{discriminator_forward.5} parent=0 // pred_check
    _
  $region7: #{discriminator_forward.5} parent=0 // pred_check_branch
    %16 = sbr.rel (0) target = $region9
  $region8: #{discriminator_forward.5} parent=0 // pred_region
    _
  $region9: #{discriminator_forward.5} parent=0 // pred_fallthru
    _
  // Predicated region
  $region10: #{discriminator_forward.5} parent=0 // pred_check
    _
  $region11: #{discriminator_forward.5} parent=0 // pred_check_branch
    %18 = sbr.rel (0) target = $region13
  $region12: #{discriminator_forward.5} parent=0 // pred_region
    _
  $region13: #{discriminator_forward.5} parent=0 // pred_fallthru
    _
  // Predicated region
  $region14: #{discriminator_forward.5} parent=0 // pred_check
    _
  $region15: #{discriminator_forward.5} parent=0 // pred_check_branch
    %20 = sbr.rel (0) target = $region17
  $region16: #{discriminator_forward.5} parent=0 // pred_region
    _
  $region17: #{discriminator_forward.5} parent=0 // pred_fallthru
    _
  // Predicated region
  $region18: #{discriminator_forward.5} parent=0 // pred_check
    _
  $region19: #{discriminator_forward.5} parent=0 // pred_check_branch
    %22 = sbr.rel (0) target = $region21
  $region20: #{discriminator_forward.5} parent=0 // pred_region
    _
  $region21: #{discriminator_forward.5} parent=0 // pred_fallthru
    _
  // Predicated region
  $region22: #{discriminator_forward.5} parent=0 // pred_check
    _
  $region23: #{discriminator_forward.5} parent=0 // pred_check_branch
    %24 = sbr.rel (0) target = $region25
  $region24: #{discriminator_forward.5} parent=0 // pred_region
    _
  $region25: #{discriminator_forward.5} parent=0 // pred_fallthru
    _
  %v26 = vld [vmem:[%s0] sm:$0xff]
  %v27 = vld [vmem:[%s0 + $0x8] sm:$0xff]
  %v28 = vld [vmem:[%s0 + $0x10] sm:$0xff]
  %v29 = vld [vmem:[%s0 + $0x18] sm:$0xff]
  %v30 = vld [vmem:[%s0 + $0x20] sm:$0xff]
  %v31 = vld [vmem:[%s0 + $0x28] sm:$0xff]
  %v32 = vld [vmem:[%s0 + $0x30] sm:$0xff]
  %v33 = vld [vmem:[%s0 + $0x38] sm:$0xff]
  %v34 = vld [vmem:[%s0 + $0x40] sm:$0xff]
  %v35 = vld [vmem:[%s0 + $0x48] sm:$0xff]
  %v36 = vld [vmem:[%s0 + $0x50] sm:$0xff]
  %v37 = vld [vmem:[%s0 + $0x58] sm:$0xff]
  %v38 = vld [vmem:[%s0 + $0x60] sm:$0xff]
  %v39 = vld [vmem:[%s0 + $0x68] sm:$0xff]
  %v40 = vld [vmem:[%s0 + $0x70] sm:$0xff]
  %v41 = vld [vmem:[%s0 + $0x78] sm:$0xff]
  %v42 = vld [vmem:[%s1] sm:$0xf]
  %v43 = vld [vmem:[%s1 + $0x4] sm:$0xf]
  %v44 = vld [vmem:[%s1 + $0x8] sm:$0xf]
  %v45 = vld [vmem:[%s1 + $0xc] sm:$0xf]
  %v46 = vld [vmem:[%s1 + $0x10] sm:$0xf]
  %v47 = vld [vmem:[%s1 + $0x14] sm:$0xf]
  %v48 = vld [vmem:[%s1 + $0x18] sm:$0xf]
  %v49 = vld [vmem:[%s1 + $0x1c] sm:$0xf]
  %v50 = vld [vmem:[%s1 + $0x20] sm:$0xf]
  %v51 = vld [vmem:[%s1 + $0x24] sm:$0xf]
  %v52 = vld [vmem:[%s1 + $0x28] sm:$0xf]
  %v53 = vld [vmem:[%s1 + $0x2c] sm:$0xf]
  %v54 = vld [vmem:[%s1 + $0x30] sm:$0xf]
  %v55 = vld [vmem:[%s1 + $0x34] sm:$0xf]
  %v56 = vld [vmem:[%s1 + $0x38] sm:$0xf]
  %v57 = vld [vmem:[%s1 + $0x3c] sm:$0xf]
  %v58 = vld [vmem:[%s1 + $0x40] sm:$0xf]
  %v59 = vld [vmem:[%s1 + $0x44] sm:$0xf]
  %v60 = vld [vmem:[%s1 + $0x48] sm:$0xf]
  %v61 = vld [vmem:[%s1 + $0x4c] sm:$0xf]
  %v62 = vld [vmem:[%s1 + $0x50] sm:$0xf]
  %v63 = vld [vmem:[%s1 + $0x54] sm:$0xf]
  %v64 = vld [vmem:[%s1 + $0x58] sm:$0xf]
  %v65 = vld [vmem:[%s1 + $0x5c] sm:$0xf]
  %v66 = vld [vmem:[%s1 + $0x60] sm:$0xf]
  %v67 = vld [vmem:[%s1 + $0x64] sm:$0xf]
  %v68 = vld [vmem:[%s1 + $0x68] sm:$0xf]
  %v69 = vld [vmem:[%s1 + $0x6c] sm:$0xf]
  %v70 = vld [vmem:[%s1 + $0x70] sm:$0xf]
  %v71 = vld [vmem:[%s1 + $0x74] sm:$0xf]
  %v72 = vld [vmem:[%s1 + $0x78] sm:$0xf]
  %v73 = vld [vmem:[%s1 + $0x7c] sm:$0xf]
  %v74 = vld [vmem:[%s1 + $0x80] sm:$0xf]
  %v75 = vld [vmem:[%s1 + $0x84] sm:$0xf]
  %v76 = vld [vmem:[%s1 + $0x88] sm:$0xf]
  %v77 = vld [vmem:[%s1 + $0x8c] sm:$0xf]
  %v78 = vld [vmem:[%s1 + $0x90] sm:$0xf]
  %v79 = vld [vmem:[%s1 + $0x94] sm:$0xf]
  %v80 = vld [vmem:[%s1 + $0x98] sm:$0xf]
  %v81 = vld [vmem:[%s1 + $0x9c] sm:$0xf]
  %v82 = vld [vmem:[%s1 + $0xa0] sm:$0xf]
  %v83 = vld [vmem:[%s1 + $0xa4] sm:$0xf]
  %v84 = vld [vmem:[%s1 + $0xa8] sm:$0xf]
  %v85 = vld [vmem:[%s1 + $0xac] sm:$0xf]
  %v86 = vld [vmem:[%s1 + $0xb0] sm:$0xf]
  %v87 = vld [vmem:[%s1 + $0xb4] sm:$0xf]
  %v88 = vld [vmem:[%s1 + $0xb8] sm:$0xf]
  %v89 = vld [vmem:[%s1 + $0xbc] sm:$0xf]
  %v90 = vld [vmem:[%s1 + $0xc0] sm:$0xf]
  %v91 = vld [vmem:[%s1 + $0xc4] sm:$0xf]
  %v92 = vld [vmem:[%s1 + $0xc8] sm:$0xf]
  %v93 = vld [vmem:[%s1 + $0xcc] sm:$0xf]
  %v94 = vld [vmem:[%s1 + $0xd0] sm:$0xf]
  %v95 = vld [vmem:[%s1 + $0xd4] sm:$0xf]
  %v96 = vld [vmem:[%s1 + $0xd8] sm:$0xf]
  %v97 = vld [vmem:[%s1 + $0xdc] sm:$0xf]
  %v98 = vld [vmem:[%s1 + $0xe0] sm:$0xf]
  %v99 = vld [vmem:[%s1 + $0xe4] sm:$0xf]
  %v100 = vld [vmem:[%s1 + $0xe8] sm:$0xf]
  %v101 = vld [vmem:[%s1 + $0xec] sm:$0xf]
  %v102 = vld [vmem:[%s1 + $0xf0] sm:$0xf]
  %v103 = vld [vmem:[%s1 + $0xf4] sm:$0xf]
  %v104 = vld [vmem:[%s1 + $0xf8] sm:$0xf]
  %v105 = vld [vmem:[%s1 + $0xfc] sm:$0xf]
  %v106 = vld [vmem:[%s1 + $0x100] sm:$0xf]
  %v107 = vld [vmem:[%s1 + $0x104] sm:$0xf]
  %v108 = vld [vmem:[%s1 + $0x108] sm:$0xf]
  %v109 = vld [vmem:[%s1 + $0x10c] sm:$0xf]
  %v110 = vld [vmem:[%s1 + $0x110] sm:$0xf]
  %v111 = vld [vmem:[%s1 + $0x114] sm:$0xf]
  %v112 = vld [vmem:[%s1 + $0x118] sm:$0xf]
  %v113 = vld [vmem:[%s1 + $0x11c] sm:$0xf]
  %v114 = vld [vmem:[%s1 + $0x120] sm:$0xf]
  %v115 = vld [vmem:[%s1 + $0x124] sm:$0xf]
  %v116 = vld [vmem:[%s1 + $0x128] sm:$0xf]
  %v117 = vld [vmem:[%s1 + $0x12c] sm:$0xf]
  %v118 = vld [vmem:[%s1 + $0x130] sm:$0xf]
  %v119 = vld [vmem:[%s1 + $0x134] sm:$0xf]
  %v120 = vld [vmem:[%s1 + $0x138] sm:$0xf]
  %v121 = vld [vmem:[%s1 + $0x13c] sm:$0xf]
  %v122 = vld [vmem:[%s1 + $0x140] sm:$0xf]
  %v123 = vld [vmem:[%s1 + $0x144] sm:$0xf]
  %v124 = vld [vmem:[%s1 + $0x148] sm:$0xf]
  %v125 = vld [vmem:[%s1 + $0x14c] sm:$0xf]
  %v126 = vld [vmem:[%s1 + $0x150] sm:$0xf]
  %v127 = vld [vmem:[%s1 + $0x154] sm:$0xf]
  %v128 = vld [vmem:[%s1 + $0x158] sm:$0xf]
  %v129 = vld [vmem:[%s1 + $0x15c] sm:$0xf]
  %v130 = vld [vmem:[%s1 + $0x160] sm:$0xf]
  %v131 = vld [vmem:[%s1 + $0x164] sm:$0xf]
  %v132 = vld [vmem:[%s1 + $0x168] sm:$0xf]
  %v133 = vld [vmem:[%s1 + $0x16c] sm:$0xf]
  %v134 = vld [vmem:[%s1 + $0x170] sm:$0xf]
  %v135 = vld [vmem:[%s1 + $0x174] sm:$0xf]
  %v136 = vld [vmem:[%s1 + $0x178] sm:$0xf]
  %v137 = vld [vmem:[%s1 + $0x17c] sm:$0xf]
  %v138 = vld [vmem:[%s1 + $0x180] sm:$0xf]
  %v139 = vld [vmem:[%s1 + $0x184] sm:$0xf]
  %v140 = vld [vmem:[%s1 + $0x188] sm:$0xf]
  %v141 = vld [vmem:[%s1 + $0x18c] sm:$0xf]
  %v142 = vld [vmem:[%s1 + $0x190] sm:$0xf]
  %v143 = vld [vmem:[%s1 + $0x194] sm:$0xf]
  %v144 = vld [vmem:[%s1 + $0x198] sm:$0xf]
  %v145 = vld [vmem:[%s1 + $0x19c] sm:$0xf]
  %v146 = vld [vmem:[%s1 + $0x1a0] sm:$0xf]
  %v147 = vld [vmem:[%s1 + $0x1a4] sm:$0xf]
  %v148 = vld [vmem:[%s1 + $0x1a8] sm:$0xf]
  %v149 = vld [vmem:[%s1 + $0x1ac] sm:$0xf]
  %v150 = vld [vmem:[%s1 + $0x1b0] sm:$0xf]
  %v151 = vld [vmem:[%s1 + $0x1b4] sm:$0xf]
  %v152 = vld [vmem:[%s1 + $0x1b8] sm:$0xf]
  %v153 = vld [vmem:[%s1 + $0x1bc] sm:$0xf]
  %v154 = vld [vmem:[%s1 + $0x1c0] sm:$0xf]
  %v155 = vld [vmem:[%s1 + $0x1c4] sm:$0xf]
  %v156 = vld [vmem:[%s1 + $0x1c8] sm:$0xf]
  %v157 = vld [vmem:[%s1 + $0x1cc] sm:$0xf]
  %v158 = vld [vmem:[%s1 + $0x1d0] sm:$0xf]
  %v159 = vld [vmem:[%s1 + $0x1d4] sm:$0xf]
  %v160 = vld [vmem:[%s1 + $0x1d8] sm:$0xf]
  %v161 = vld [vmem:[%s1 + $0x1dc] sm:$0xf]
  %v162 = vld [vmem:[%s1 + $0x1e0] sm:$0xf]
  %v163 = vld [vmem:[%s1 + $0x1e4] sm:$0xf]
  %v164 = vld [vmem:[%s1 + $0x1e8] sm:$0xf]
  %v165 = vld [vmem:[%s1 + $0x1ec] sm:$0xf]
  %v166 = vld [vmem:[%s1 + $0x1f0] sm:$0xf]
  %v167 = vld [vmem:[%s1 + $0x1f4] sm:$0xf]
  %v168 = vld [vmem:[%s1 + $0x1f8] sm:$0xf]
  %v169 = vld [vmem:[%s1 + $0x1fc] sm:$0xf]
  %v186 = vunpack.c.l.b16 %v26
  %v187 = vunpack.c.h.b16 %v26
  %v188 = vunpack.c.l.b16 %v27
  %v189 = vunpack.c.h.b16 %v27
  %v190 = vunpack.c.l.b16 %v28
  %v191 = vunpack.c.h.b16 %v28
  %v192 = vunpack.c.l.b16 %v29
  %v193 = vunpack.c.h.b16 %v29
  %v194 = vunpack.c.l.b16 %v30
  %v195 = vunpack.c.h.b16 %v30
  %v196 = vunpack.c.l.b16 %v31
  %v197 = vunpack.c.h.b16 %v31
  %v198 = vunpack.c.l.b16 %v32
  %v199 = vunpack.c.h.b16 %v32
  %v200 = vunpack.c.l.b16 %v33
  %v201 = vunpack.c.h.b16 %v33
  %v202 = vunpack.c.l.b16 %v34
  %v203 = vunpack.c.h.b16 %v34
  %v204 = vunpack.c.l.b16 %v35
  %v205 = vunpack.c.h.b16 %v35
  %v206 = vunpack.c.l.b16 %v36
  %v207 = vunpack.c.h.b16 %v36
  %v208 = vunpack.c.l.b16 %v37
  %v209 = vunpack.c.h.b16 %v37
  %v210 = vunpack.c.l.b16 %v38
  %v211 = vunpack.c.h.b16 %v38
  %v212 = vunpack.c.l.b16 %v39
  %v213 = vunpack.c.h.b16 %v39
  %v214 = vunpack.c.l.b16 %v40
  %v215 = vunpack.c.h.b16 %v40
  %v216 = vunpack.c.l.b16 %v41
  %v217 = vunpack.c.h.b16 %v41
  %v218 = vpack.c.b16 %v194, %v186
  %v219 = vpack.c.b16 %v195, %v187
  %v220 = vpack.c.b16 %v196, %v188
  %v221 = vpack.c.b16 %v197, %v189
  %v222 = vpack.c.b16 %v198, %v190
  %v223 = vpack.c.b16 %v199, %v191
  %v224 = vpack.c.b16 %v200, %v192
  %v225 = vpack.c.b16 %v201, %v193
  %v226 = vpack.c.b16 %v210, %v202
  %v227 = vpack.c.b16 %v211, %v203
  %v228 = vpack.c.b16 %v212, %v204
  %v229 = vpack.c.b16 %v213, %v205
  %v230 = vpack.c.b16 %v214, %v206
  %v231 = vpack.c.b16 %v215, %v207
  %v232 = vpack.c.b16 %v216, %v208
  %v233 = vpack.c.b16 %v217, %v209
  %v378 = vunpack.c.l.b16 %v42
  %v379 = vunpack.c.l.b16 %v43
  %v380 = vunpack.c.l.b16 %v44
  %v381 = vunpack.c.l.b16 %v45
  %v382 = vunpack.c.l.b16 %v46
  %v383 = vunpack.c.l.b16 %v47
  %v384 = vunpack.c.l.b16 %v48
  %v385 = vunpack.c.l.b16 %v49
  %v386 = vunpack.c.l.b16 %v50
  %v387 = vunpack.c.l.b16 %v51
  %v388 = vunpack.c.l.b16 %v52
  %v389 = vunpack.c.l.b16 %v53
  %v390 = vunpack.c.l.b16 %v54
  %v391 = vunpack.c.l.b16 %v55
  %v392 = vunpack.c.l.b16 %v56
  %v393 = vunpack.c.l.b16 %v57
  %v394 = vunpack.c.l.b16 %v58
  %v395 = vunpack.c.l.b16 %v59
  %v396 = vunpack.c.l.b16 %v60
  %v397 = vunpack.c.l.b16 %v61
  %v398 = vunpack.c.l.b16 %v62
  %v399 = vunpack.c.l.b16 %v63
  %v400 = vunpack.c.l.b16 %v64
  %v401 = vunpack.c.l.b16 %v65
  %v402 = vunpack.c.l.b16 %v66
  %v403 = vunpack.c.l.b16 %v67
  %v404 = vunpack.c.l.b16 %v68
  %v405 = vunpack.c.l.b16 %v69
  %v406 = vunpack.c.l.b16 %v70
  %v407 = vunpack.c.l.b16 %v71
  %v408 = vunpack.c.l.b16 %v72
  %v409 = vunpack.c.l.b16 %v73
  %v410 = vunpack.c.l.b16 %v74
  %v411 = vunpack.c.l.b16 %v75
  %v412 = vunpack.c.l.b16 %v76
  %v413 = vunpack.c.l.b16 %v77
  %v414 = vunpack.c.l.b16 %v78
  %v415 = vunpack.c.l.b16 %v79
  %v416 = vunpack.c.l.b16 %v80
  %v417 = vunpack.c.l.b16 %v81
  %v418 = vunpack.c.l.b16 %v82
  %v419 = vunpack.c.l.b16 %v83
  %v420 = vunpack.c.l.b16 %v84
  %v421 = vunpack.c.l.b16 %v85
  %v422 = vunpack.c.l.b16 %v86
  %v423 = vunpack.c.l.b16 %v87
  %v424 = vunpack.c.l.b16 %v88
  %v425 = vunpack.c.l.b16 %v89
  %v426 = vunpack.c.l.b16 %v90
  %v427 = vunpack.c.l.b16 %v91
  %v428 = vunpack.c.l.b16 %v92
  %v429 = vunpack.c.l.b16 %v93
  %v430 = vunpack.c.l.b16 %v94
  %v431 = vunpack.c.l.b16 %v95
  %v432 = vunpack.c.l.b16 %v96
  %v433 = vunpack.c.l.b16 %v97
  %v434 = vunpack.c.l.b16 %v98
  %v435 = vunpack.c.l.b16 %v99
  %v436 = vunpack.c.l.b16 %v100
  %v437 = vunpack.c.l.b16 %v101
  %v438 = vunpack.c.l.b16 %v102
  %v439 = vunpack.c.l.b16 %v103
  %v440 = vunpack.c.l.b16 %v104
  %v441 = vunpack.c.l.b16 %v105
  %v442 = vunpack.c.l.b16 %v106
  %v443 = vunpack.c.l.b16 %v107
  %v444 = vunpack.c.l.b16 %v108
  %v445 = vunpack.c.l.b16 %v109
  %v446 = vunpack.c.l.b16 %v110
  %v447 = vunpack.c.l.b16 %v111
  %v448 = vunpack.c.l.b16 %v112
  %v449 = vunpack.c.l.b16 %v113
  %v450 = vunpack.c.l.b16 %v114
  %v451 = vunpack.c.l.b16 %v115
  %v452 = vunpack.c.l.b16 %v116
  %v453 = vunpack.c.l.b16 %v117
  %v454 = vunpack.c.l.b16 %v118
  %v455 = vunpack.c.l.b16 %v119
  %v456 = vunpack.c.l.b16 %v120
  %v457 = vunpack.c.l.b16 %v121
  %v458 = vunpack.c.l.b16 %v122
  %v459 = vunpack.c.l.b16 %v123
  %v460 = vunpack.c.l.b16 %v124
  %v461 = vunpack.c.l.b16 %v125
  %v462 = vunpack.c.l.b16 %v126
  %v463 = vunpack.c.l.b16 %v127
  %v464 = vunpack.c.l.b16 %v128
  %v465 = vunpack.c.l.b16 %v129
  %v466 = vunpack.c.l.b16 %v130
  %v467 = vunpack.c.l.b16 %v131
  %v468 = vunpack.c.l.b16 %v132
  %v469 = vunpack.c.l.b16 %v133
  %v470 = vunpack.c.l.b16 %v134
  %v471 = vunpack.c.l.b16 %v135
  %v472 = vunpack.c.l.b16 %v136
  %v473 = vunpack.c.l.b16 %v137
  %v474 = vunpack.c.l.b16 %v138
  %v475 = vunpack.c.l.b16 %v139
  %v476 = vunpack.c.l.b16 %v140
  %v477 = vunpack.c.l.b16 %v141
  %v478 = vunpack.c.l.b16 %v142
  %v479 = vunpack.c.l.b16 %v143
  %v480 = vunpack.c.l.b16 %v144
  %v481 = vunpack.c.l.b16 %v145
  %v482 = vunpack.c.l.b16 %v146
  %v483 = vunpack.c.l.b16 %v147
  %v484 = vunpack.c.l.b16 %v148
  %v485 = vunpack.c.l.b16 %v149
  %v486 = vunpack.c.l.b16 %v150
  %v487 = vunpack.c.l.b16 %v151
  %v488 = vunpack.c.l.b16 %v152
  %v489 = vunpack.c.l.b16 %v153
  %v490 = vunpack.c.l.b16 %v154
  %v491 = vunpack.c.l.b16 %v155
  %v492 = vunpack.c.l.b16 %v156
  %v493 = vunpack.c.l.b16 %v157
  %v494 = vunpack.c.l.b16 %v158
  %v495 = vunpack.c.l.b16 %v159
  %v496 = vunpack.c.l.b16 %v160
  %v497 = vunpack.c.l.b16 %v161
  %v498 = vunpack.c.l.b16 %v162
  %v499 = vunpack.c.l.b16 %v163
  %v500 = vunpack.c.l.b16 %v164
  %v501 = vunpack.c.l.b16 %v165
  %v502 = vunpack.c.l.b16 %v166
  %v503 = vunpack.c.l.b16 %v167
  %v504 = vunpack.c.l.b16 %v168
  %v505 = vunpack.c.l.b16 %v169
  %v506 = vpack.c.b16 %v379, %v378
  %v507 = vpack.c.b16 %v381, %v380
  %v508 = vpack.c.b16 %v383, %v382
  %v509 = vpack.c.b16 %v385, %v384
  %v510 = vpack.c.b16 %v387, %v386
  %v511 = vpack.c.b16 %v389, %v388
  %v512 = vpack.c.b16 %v391, %v390
  %v513 = vpack.c.b16 %v393, %v392
  %v514 = vpack.c.b16 %v395, %v394
  %v515 = vpack.c.b16 %v397, %v396
  %v516 = vpack.c.b16 %v399, %v398
  %v517 = vpack.c.b16 %v401, %v400
  %v518 = vpack.c.b16 %v403, %v402
  %v519 = vpack.c.b16 %v405, %v404
  %v520 = vpack.c.b16 %v407, %v406
  %v521 = vpack.c.b16 %v409, %v408
  %v522 = vpack.c.b16 %v411, %v410
  %v523 = vpack.c.b16 %v413, %v412
  %v524 = vpack.c.b16 %v415, %v414
  %v525 = vpack.c.b16 %v417, %v416
  %v526 = vpack.c.b16 %v419, %v418
  %v527 = vpack.c.b16 %v421, %v420
  %v528 = vpack.c.b16 %v423, %v422
  %v529 = vpack.c.b16 %v425, %v424
  %v530 = vpack.c.b16 %v427, %v426
  %v531 = vpack.c.b16 %v429, %v428
  %v532 = vpack.c.b16 %v431, %v430
  %v533 = vpack.c.b16 %v433, %v432
  %v534 = vpack.c.b16 %v435, %v434
  %v535 = vpack.c.b16 %v437, %v436
  %v536 = vpack.c.b16 %v439, %v438
  %v537 = vpack.c.b16 %v441, %v440
  %v538 = vpack.c.b16 %v443, %v442
  %v539 = vpack.c.b16 %v445, %v444
  %v540 = vpack.c.b16 %v447, %v446
  %v541 = vpack.c.b16 %v449, %v448
  %v542 = vpack.c.b16 %v451, %v450
  %v543 = vpack.c.b16 %v453, %v452
  %v544 = vpack.c.b16 %v455, %v454
  %v545 = vpack.c.b16 %v457, %v456
  %v546 = vpack.c.b16 %v459, %v458
  %v547 = vpack.c.b16 %v461, %v460
  %v548 = vpack.c.b16 %v463, %v462
  %v549 = vpack.c.b16 %v465, %v464
  %v550 = vpack.c.b16 %v467, %v466
  %v551 = vpack.c.b16 %v469, %v468
  %v552 = vpack.c.b16 %v471, %v470
  %v553 = vpack.c.b16 %v473, %v472
  %v554 = vpack.c.b16 %v475, %v474
  %v555 = vpack.c.b16 %v477, %v476
  %v556 = vpack.c.b16 %v479, %v478
  %v557 = vpack.c.b16 %v481, %v480
  %v558 = vpack.c.b16 %v483, %v482
  %v559 = vpack.c.b16 %v485, %v484
  %v560 = vpack.c.b16 %v487, %v486
  %v561 = vpack.c.b16 %v489, %v488
  %v562 = vpack.c.b16 %v491, %v490
  %v563 = vpack.c.b16 %v493, %v492
  %v564 = vpack.c.b16 %v495, %v494
  %v565 = vpack.c.b16 %v497, %v496
  %v566 = vpack.c.b16 %v499, %v498
  %v567 = vpack.c.b16 %v501, %v500
  %v568 = vpack.c.b16 %v503, %v502
  %v569 = vpack.c.b16 %v505, %v504
  %634 = vmatprep.subr.bf16.mxu0 0
  %635 = vmatpush1.bf16.msra.mxu0 %v513
  %636 = vmatprep.subr.bf16.mxu0 0
  %637 = vmatpush1.bf16.msra.mxu0 %v512
  %638 = vmatprep.subr.bf16.mxu0 0
  %639 = vmatpush1.bf16.msra.mxu0 %v511
  %640 = vmatprep.subr.bf16.mxu0 0
  %641 = vmatpush1.bf16.msra.mxu0 %v510
  %642 = vmatprep.subr.bf16.mxu0 0
  %643 = vmatpush1.bf16.msra.mxu0 %v509
  %644 = vmatprep.subr.bf16.mxu0 0
  %645 = vmatpush1.bf16.msra.mxu0 %v508
  %646 = vmatprep.subr.bf16.mxu0 0
  %647 = vmatpush1.bf16.msra.mxu0 %v507
  %648 = vmatprep.subr.bf16.mxu0 0
  %649 = vmatpush1.bf16.msra.mxu0 %v506
  %650 = vmatprep.subr.bf16.mxu0 0
  %651 = vmatpush2.bf16.msra.mxu0 %v521
  %652 = vmatprep.subr.bf16.mxu0 0
  %653 = vmatpush2.bf16.msra.mxu0 %v520
  %654 = vmatprep.subr.bf16.mxu0 0
  %655 = vmatpush2.bf16.msra.mxu0 %v519
  %656 = vmatprep.subr.bf16.mxu0 0
  %657 = vmatpush2.bf16.msra.mxu0 %v518
  %658 = vmatprep.subr.bf16.mxu0 0
  %659 = vmatpush2.bf16.msra.mxu0 %v517
  %660 = vmatprep.subr.bf16.mxu0 0
  %661 = vmatpush2.bf16.msra.mxu0 %v516
  %662 = vmatprep.subr.bf16.mxu0 0
  %663 = vmatpush2.bf16.msra.mxu0 %v515
  %664 = vmatprep.subr.bf16.mxu0 0
  %665 = vmatpush2.bf16.msra.mxu0 %v514
  %666 = vmatprep.mubr.bf16.mxu0 %v219
  %667 = vmatmul.mubr.bf16.gmra.mxu0 %v218
  %v668 = vpop.f32.mrf.mxu0
  %v669 = vadd.f32 0.0, %v668
  %v670 = vpop.f32.mrf.mxu0
  %v671 = vpop.f32.mrf.mxu0
  %v672 = vadd.f32 0.0, %v671
  %v673 = vpop.f32.mrf.mxu0
  %674 = vmatprep.mubr.bf16.mxu0 %v227
  %675 = vmatmul.mubr.bf16.gmra.mxu0 %v226
  %v676 = vpop.f32.mrf.mxu0
  %v677 = vadd.f32 0.0, %v676
  %v678 = vpop.f32.mrf.mxu0
  %v679 = vpop.f32.mrf.mxu0
  %v680 = vadd.f32 0.0, %v679
  %v681 = vpop.f32.mrf.mxu0
  %682 = vdwg.mxu0
  %683 = vmatprep.subr.bf16.mxu0 0
  %684 = vmatpush1.bf16.msra.mxu0 %v529
  %685 = vmatprep.subr.bf16.mxu0 0
  %686 = vmatpush1.bf16.msra.mxu0 %v528
  %687 = vmatprep.subr.bf16.mxu0 0
  %688 = vmatpush1.bf16.msra.mxu0 %v527
  %689 = vmatprep.subr.bf16.mxu0 0
  %690 = vmatpush1.bf16.msra.mxu0 %v526
  %691 = vmatprep.subr.bf16.mxu0 0
  %692 = vmatpush1.bf16.msra.mxu0 %v525
  %693 = vmatprep.subr.bf16.mxu0 0
  %694 = vmatpush1.bf16.msra.mxu0 %v524
  %695 = vmatprep.subr.bf16.mxu0 0
  %696 = vmatpush1.bf16.msra.mxu0 %v523
  %697 = vmatprep.subr.bf16.mxu0 0
  %698 = vmatpush1.bf16.msra.mxu0 %v522
  %699 = vmatprep.subr.bf16.mxu0 0
  %700 = vmatpush2.bf16.msra.mxu0 %v537
  %701 = vmatprep.subr.bf16.mxu0 0
  %702 = vmatpush2.bf16.msra.mxu0 %v536
  %703 = vmatprep.subr.bf16.mxu0 0
  %704 = vmatpush2.bf16.msra.mxu0 %v535
  %705 = vmatprep.subr.bf16.mxu0 0
  %706 = vmatpush2.bf16.msra.mxu0 %v534
  %707 = vmatprep.subr.bf16.mxu0 0
  %708 = vmatpush2.bf16.msra.mxu0 %v533
  %709 = vmatprep.subr.bf16.mxu0 0
  %710 = vmatpush2.bf16.msra.mxu0 %v532
  %711 = vmatprep.subr.bf16.mxu0 0
  %712 = vmatpush2.bf16.msra.mxu0 %v531
  %713 = vmatprep.subr.bf16.mxu0 0
  %714 = vmatpush2.bf16.msra.mxu0 %v530
  %715 = vmatprep.mubr.bf16.mxu0 %v221
  %716 = vmatmul.mubr.bf16.gmra.mxu0 %v220
  %v717 = vpop.f32.mrf.mxu0
  %v718 = vadd.f32 %v669, %v717
  %v719 = vpop.f32.mrf.mxu0
  %v720 = vpop.f32.mrf.mxu0
  %v721 = vadd.f32 %v672, %v720
  %v722 = vpop.f32.mrf.mxu0
  %723 = vmatprep.mubr.bf16.mxu0 %v229
  %724 = vmatmul.mubr.bf16.gmra.mxu0 %v228
  %v725 = vpop.f32.mrf.mxu0
  %v726 = vadd.f32 %v677, %v725
  %v727 = vpop.f32.mrf.mxu0
  %v728 = vpop.f32.mrf.mxu0
  %v729 = vadd.f32 %v680, %v728
  %v730 = vpop.f32.mrf.mxu0
  %731 = vdwg.mxu0
  %732 = vmatprep.subr.bf16.mxu0 0
  %733 = vmatpush1.bf16.msra.mxu0 %v545
  %734 = vmatprep.subr.bf16.mxu0 0
  %735 = vmatpush1.bf16.msra.mxu0 %v544
  %736 = vmatprep.subr.bf16.mxu0 0
  %737 = vmatpush1.bf16.msra.mxu0 %v543
  %738 = vmatprep.subr.bf16.mxu0 0
  %739 = vmatpush1.bf16.msra.mxu0 %v542
  %740 = vmatprep.subr.bf16.mxu0 0
  %741 = vmatpush1.bf16.msra.mxu0 %v541
  %742 = vmatprep.subr.bf16.mxu0 0
  %743 = vmatpush1.bf16.msra.mxu0 %v540
  %744 = vmatprep.subr.bf16.mxu0 0
  %745 = vmatpush1.bf16.msra.mxu0 %v539
  %746 = vmatprep.subr.bf16.mxu0 0
  %747 = vmatpush1.bf16.msra.mxu0 %v538
  %748 = vmatprep.subr.bf16.mxu0 0
  %749 = vmatpush2.bf16.msra.mxu0 %v553
  %750 = vmatprep.subr.bf16.mxu0 0
  %751 = vmatpush2.bf16.msra.mxu0 %v552
  %752 = vmatprep.subr.bf16.mxu0 0
  %753 = vmatpush2.bf16.msra.mxu0 %v551
  %754 = vmatprep.subr.bf16.mxu0 0
  %755 = vmatpush2.bf16.msra.mxu0 %v550
  %756 = vmatprep.subr.bf16.mxu0 0
  %757 = vmatpush2.bf16.msra.mxu0 %v549
  %758 = vmatprep.subr.bf16.mxu0 0
  %759 = vmatpush2.bf16.msra.mxu0 %v548
  %760 = vmatprep.subr.bf16.mxu0 0
  %761 = vmatpush2.bf16.msra.mxu0 %v547
  %762 = vmatprep.subr.bf16.mxu0 0
  %763 = vmatpush2.bf16.msra.mxu0 %v546
  %764 = vmatprep.mubr.bf16.mxu0 %v223
  %765 = vmatmul.mubr.bf16.gmra.mxu0 %v222
  %v766 = vpop.f32.mrf.mxu0
  %v767 = vadd.f32 %v718, %v766
  %v768 = vpop.f32.mrf.mxu0
  %v769 = vpop.f32.mrf.mxu0
  %v770 = vadd.f32 %v721, %v769
  %v771 = vpop.f32.mrf.mxu0
  %772 = vmatprep.mubr.bf16.mxu0 %v231
  %773 = vmatmul.mubr.bf16.gmra.mxu0 %v230
  %v774 = vpop.f32.mrf.mxu0
  %v775 = vadd.f32 %v726, %v774
  %v776 = vpop.f32.mrf.mxu0
  %v777 = vpop.f32.mrf.mxu0
  %v778 = vadd.f32 %v729, %v777
  %v779 = vpop.f32.mrf.mxu0
  %780 = vdwg.mxu0
  %781 = vmatprep.subr.bf16.mxu0 0
  %782 = vmatpush1.bf16.msra.mxu0 %v561
  %783 = vmatprep.subr.bf16.mxu0 0
  %784 = vmatpush1.bf16.msra.mxu0 %v560
  %785 = vmatprep.subr.bf16.mxu0 0
  %786 = vmatpush1.bf16.msra.mxu0 %v559
  %787 = vmatprep.subr.bf16.mxu0 0
  %788 = vmatpush1.bf16.msra.mxu0 %v558
  %789 = vmatprep.subr.bf16.mxu0 0
  %790 = vmatpush1.bf16.msra.mxu0 %v557
  %791 = vmatprep.subr.bf16.mxu0 0
  %792 = vmatpush1.bf16.msra.mxu0 %v556
  %793 = vmatprep.subr.bf16.mxu0 0
  %794 = vmatpush1.bf16.msra.mxu0 %v555
  %795 = vmatprep.subr.bf16.mxu0 0
  %796 = vmatpush1.bf16.msra.mxu0 %v554
  %797 = vmatprep.subr.bf16.mxu0 0
  %798 = vmatpush2.bf16.msra.mxu0 %v569
  %799 = vmatprep.subr.bf16.mxu0 0
  %800 = vmatpush2.bf16.msra.mxu0 %v568
  %801 = vmatprep.subr.bf16.mxu0 0
  %802 = vmatpush2.bf16.msra.mxu0 %v567
  %803 = vmatprep.subr.bf16.mxu0 0
  %804 = vmatpush2.bf16.msra.mxu0 %v566
  %805 = vmatprep.subr.bf16.mxu0 0
  %806 = vmatpush2.bf16.msra.mxu0 %v565
  %807 = vmatprep.subr.bf16.mxu0 0
  %808 = vmatpush2.bf16.msra.mxu0 %v564
  %809 = vmatprep.subr.bf16.mxu0 0
  %810 = vmatpush2.bf16.msra.mxu0 %v563
  %811 = vmatprep.subr.bf16.mxu0 0
  %812 = vmatpush2.bf16.msra.mxu0 %v562
  %813 = vmatprep.mubr.bf16.mxu0 %v225
  %814 = vmatmul.mubr.bf16.gmra.mxu0 %v224
  %v815 = vpop.f32.mrf.mxu0
  %v816 = vadd.f32 %v767, %v815
  %v817 = vpop.f32.mrf.mxu0
  %v818 = vpop.f32.mrf.mxu0
  %v819 = vadd.f32 %v770, %v818
  %v820 = vpop.f32.mrf.mxu0
  %821 = vmatprep.mubr.bf16.mxu0 %v233
  %822 = vmatmul.mubr.bf16.gmra.mxu0 %v232
  %v823 = vpop.f32.mrf.mxu0
  %v824 = vadd.f32 %v775, %v823
  %v825 = vpop.f32.mrf.mxu0
  %v826 = vpop.f32.mrf.mxu0
  %v827 = vadd.f32 %v778, %v826
  %v828 = vpop.f32.mrf.mxu0
  %829 = vdwg.mxu0
  %v830 = vld [vmem:[%s2] sm:$0x1]
  %v832 = vlaneseq
  %v833 = vshrl.u32 %v832, 7
  %v834 = vsub.s32 0, %v833
  %v835 = vrot.slane %v830, %v834
  %v837 = vmul.f32 %v816, %v835
  %v838 = vmul.f32 %v819, %v835
  %v839 = vmul.f32 %v824, %v835
  %v840 = vmul.f32 %v827, %v835
  %v841 = vld [vmem:[%s3] sm:$0x1]
  %v843 = vlaneseq
  %v844 = vshrl.u32 %v843, 7
  %v845 = vsub.s32 0, %v844
  %v846 = vrot.slane %v841, %v845
  %v848 = vadd.f32 %v837, %v846
  %v849 = vadd.f32 %v838, %v846
  %v850 = vadd.f32 %v839, %v846
  %v851 = vadd.f32 %v840, %v846
  %vm852 = vcmp.ge.f32.partialorder %v848, 0.0
  %vm853 = vcmp.ge.f32.partialorder %v849, 0.0
  %vm854 = vcmp.ge.f32.partialorder %v850, 0.0
  %vm855 = vcmp.ge.f32.partialorder %v851, 0.0
  %v856 = vmul.f32 %v848, 0.2
  %v857 = vmul.f32 %v849, 0.2
  %v858 = vmul.f32 %v850, 0.2
  %v859 = vmul.f32 %v851, 0.2
  %v860 = vsel %vm852, %v848, %v856
  %v861 = vsel %vm853, %v849, %v857
  %v862 = vsel %vm854, %v850, %v858
  %v863 = vsel %vm855, %v851, %v859
  %v864 = vld [vmem:[%s4] sm:$0xff]
  %v865 = vld [vmem:[%s4 + $0x8] sm:$0xff]
  %v866 = vmul.f32 %v860, %v864
  %v867 = vmul.f32 %v861, %v865
  %v868 = vmul.f32 %v862, %v864
  %v869 = vmul.f32 %v863, %v865
  %870 = vadd.xlane.f32.xlu0 %v866
  %v871 = vpop.xlane.xlu0 %870
  %872 = vadd.xlane.f32.xlu0 %v867
  %v873 = vpop.xlane.xlu0 %872
  %874 = vadd.xlane.f32.xlu0 %v868
  %v875 = vpop.xlane.xlu0 %874
  %876 = vadd.xlane.f32.xlu0 %v869
  %v877 = vpop.xlane.xlu0 %876
  %v882 = vlaneseq
  %v883 = vand.u32 %v882, 127
  %v884 = vlaneseq
  %v885 = vshrl.u32 %v884, 7
  %v886 = vsub.s32 %v883, %v885
  %v887 = vrot.slane %v871, %v886
  %v888 = vadd.s32 %v883, 4294967288
  %v889 = vlaneseq
  %v890 = vshrl.u32 %v889, 7
  %v891 = vsub.s32 %v888, %v890
  %v892 = vrot.slane %v873, %v891
  %vm893 = vcmask 130112
  %v894 = vsel %vm893, %v892, %v887
  %v895 = vlaneseq
  %v896 = vshrl.u32 %v895, 7
  %v897 = vsub.s32 %v883, %v896
  %v898 = vrot.slane %v875, %v897
  %v899 = vlaneseq
  %v900 = vshrl.u32 %v899, 7
  %v901 = vsub.s32 %v888, %v900
  %v902 = vrot.slane %v877, %v901
  %v903 = vsel %vm893, %v902, %v898
  %vm904 = vcmask 1041409
  %v905 = vsel %vm904, %v903, %v894
  %vm907 = vcmask 123904
  %v908 = vsel %vm907, %v905, 0.0
  %909 = vadd.xlane.f32.xlu0 %v908
  %v910 = vpop.xlane.xlu0 %909
  %v911 = vld [vmem:[#allocation2] sm:$0x1]
  %v913 = vlaneseq
  %v914 = vshrl.u32 %v913, 7
  %v915 = vsub.s32 0, %v914
  %v916 = vrot.slane %v911, %v915
  %v918 = vadd.f32 %v910, %v916
  %v919 = vxor.u32 %v918, 2147483648
  %v920 = vmul.f32 %v919, 1.442695
  %v921 = vpow.pop %v920
  %v922 = vadd.f32 %v921, 1.0
  %v923 = vrcp.pop %v922
  %v924 = vmul.f32 1.0, %v923
  %vm925 = vcmask 1024
  %926 = vst.msk [vmem:[%s6] sm:$0x3] %vm925, %v924
  // Predicated region
  $region26: #{discriminator_forward.5} parent=0 // pred_check
    _
  $region27: #{discriminator_forward.5} parent=0 // pred_check_branch
    %928 = sbr.rel (0) target = $region29
  $region28: #{discriminator_forward.5} parent=0 // pred_region
    _
  $region29: #{discriminator_forward.5} parent=0 // pred_fallthru
    _
  // Predicated region
  $region30: #{discriminator_forward.5} parent=0 // pred_check
    _
  $region31: #{discriminator_forward.5} parent=0 // pred_check_branch
    %930 = sbr.rel (0) target = $region33
  $region32: #{discriminator_forward.5} parent=0 // pred_region
    _
  $region33: #{discriminator_forward.5} parent=0 // pred_fallthru
    _

</llo_original>
